<compile_context>
chip_gen: v5e
topology: v5e:2x2
jax: 0.10.0
libtpu: 0.0.40
codegen_flags: <defaults>
</compile_context>

<pallas_src>
import functools

import jax
import jax.numpy as jnp
from jax import lax
from jax.experimental import pallas as pl
from jax.experimental.pallas import tpu as pltpu


_VMEM_LIMIT_BYTES = 64 * 1024 * 1024  # <= 64 MiB so the budget also holds on v7x


# ----------------------------------------------------------------------------
# In-kernel helpers
# ----------------------------------------------------------------------------
def _zero_margins(ref, c, H, W, mh, mw):
    """Zero only the padding margins of a (c, H+2mh, W+2mw) f32 scratch."""
    Hp, Wp = H + 2 * mh, W + 2 * mw
    f32 = jnp.float32
    if mh > 0:
        ref[:, 0:mh, :] = jnp.zeros((c, mh, Wp), f32)            # top strip
        ref[:, mh + H:Hp, :] = jnp.zeros((c, mh, Wp), f32)       # bottom strip
    if mw > 0:
        ref[:, mh:mh + H, 0:mw] = jnp.zeros((c, H, mw), f32)     # left strip
        ref[:, mh:mh + H, mw + W:Wp] = jnp.zeros((c, H, mw), f32)  # right strip


def _accumulate_taps(src_ref, w_ref, *, cin, cout, K, dil, H, W, mh, mw):
    """Tap-outer 'same' convolution over a padded VMEM buffer.

    src_ref : (cin, H+2mh, W+2mw) f32 padded input (zero margins).
    w_ref   : SMEM 1-D flattened (cout, cin, K, K) weights.
    Returns a list of cout (H, W) f32 accumulations (two chains per output
    channel, summed at the end).
    """
    kc = K // 2
    n_taps = cin * K * K
    acc_a = [None] * cout
    acc_b = [None] * cout
    t = 0
    for c in range(cin):
        for kh in range(K):
            r0 = mh + (kh - kc) * dil
            for kw in range(K):
                c0 = mw + (kw - kc) * dil
                # Load this tap's shifted slab once; feed all outputs.
                slab = src_ref[c, r0:r0 + H, c0:c0 + W]
                for o in range(cout):
                    contrib = w_ref[o * n_taps + t] * slab
                    if t % 2 == 0:
                        acc_a[o] = contrib if acc_a[o] is None else acc_a[o] + contrib
                    else:
                        acc_b[o] = contrib if acc_b[o] is None else acc_b[o] + contrib
                t += 1
    out = []
    for o in range(cout):
        out.append(acc_a[o] if acc_b[o] is None else acc_a[o] + acc_b[o])
    return out


# ----------------------------------------------------------------------------
# Kernels (one batch item per grid step)
# ----------------------------------------------------------------------------
def _conv_bn_relu_kernel(x_ref, w_ref, shift_ref, o_ref, xp_ref,
                         *, cin, cout, K, dil, H, W, mh, mw):
    """o = relu(conv_same(x, w_bn_folded) + shift) for one batch item."""
    _zero_margins(xp_ref, cin, H, W, mh, mw)
    xp_ref[:, mh:mh + H, mw:mw + W] = x_ref[0].astype(jnp.float32)

    sums = _accumulate_taps(xp_ref, w_ref, cin=cin, cout=cout, K=K, dil=dil,
                            H=H, W=W, mh=mh, mw=mw)
    for o in range(cout):
        y = jnp.maximum(sums[o] + shift_ref[o], 0.0)
        o_ref[0, o] = y.astype(o_ref.dtype)


def _resblock_kernel(x_ref, w1_ref, shift_ref, w2_ref, o_ref, xp_ref, hp_ref,
                     *, C, K, dil, H, W, mh, mw):
    """o = relu(x + conv2(relu(conv1_bn_folded(x) + shift))) for one batch."""
    f32 = jnp.float32
    _zero_margins(xp_ref, C, H, W, mh, mw)
    _zero_margins(hp_ref, C, H, W, mh, mw)
    xp_ref[:, mh:mh + H, mw:mw + W] = x_ref[0].astype(f32)

    # conv1 (BN scale pre-folded into w1) + shift + ReLU -> padded intermediate
    sums1 = _accumulate_taps(xp_ref, w1_ref, cin=C, cout=C, K=K, dil=dil,
                             H=H, W=W, mh=mh, mw=mw)
    for o in range(C):
        hp_ref[o, mh:mh + H, mw:mw + W] = jnp.maximum(sums1[o] + shift_ref[o], 0.0)

    # conv2 + residual add + ReLU
    sums2 = _accumulate_taps(hp_ref, w2_ref, cin=C, cout=C, K=K, dil=dil,
                             H=H, W=W, mh=mh, mw=mw)
    for o in range(C):
        y = jnp.maximum(x_ref[0, o].astype(f32) + sums2[o], 0.0)
        o_ref[0, o] = y.astype(o_ref.dtype)


# ----------------------------------------------------------------------------
# Wrappers (one pallas_call per fused layer; no transposes, no wrapper pads)
# ----------------------------------------------------------------------------
def _fold_bn(gamma, beta, mean, var, eps=1e-5):
    scale = gamma / jnp.sqrt(var + eps)
    return scale, beta - mean * scale


def conv_bn_relu(x, w, scale, shift, *, dil):
    N, Cin, H, W = x.shape
    Cout, _, K, _ = w.shape
    pad = dil * (K // 2)
    mh = mw = pad                      # exact 'same' margins, no 8/128 rounding
    Hp, Wp = H + 2 * mh, W + 2 * mw
    # Fold the BN scale into the conv weights at trace time (free for the kernel).
    w_folded = (w * scale[:, None, None, None]).reshape(-1)
    kernel = functools.partial(_conv_bn_relu_kernel, cin=Cin, cout=Cout, K=K,
                               dil=dil, H=H, W=W, mh=mh, mw=mw)
    flops = 2 * N * Cout * Cin * K * K * H * W
    bytes_accessed = 4 * (N * Cin * H * W + N * Cout * H * W
                          + Cout * Cin * K * K + Cout)
    # NOTE: grid=(N,) marked "parallel"; keep N even for full v7x megacore use.
    return pl.pallas_call(
        kernel,
        out_shape=jax.ShapeDtypeStruct((N, Cout, H, W), x.dtype),
        grid=(N,),
        in_specs=[
            pl.BlockSpec((1, Cin, H, W), lambda n: (n, 0, 0, 0)),
            pl.BlockSpec(memory_space=pltpu.MemorySpace.SMEM),
            pl.BlockSpec(memory_space=pltpu.MemorySpace.SMEM),
        ],
        out_specs=pl.BlockSpec((1, Cout, H, W), lambda n: (n, 0, 0, 0)),
        scratch_shapes=[pltpu.VMEM((Cin, Hp, Wp), jnp.float32)],
        compiler_params=pltpu.CompilerParams(
            dimension_semantics=("parallel",),
            vmem_limit_bytes=_VMEM_LIMIT_BYTES),
        cost_estimate=pl.CostEstimate(flops=flops, transcendentals=0,
                                      bytes_accessed=bytes_accessed),
    )(x, w_folded, shift)


def res_block2d(x, w1, scale, shift, w2, *, dil):
    N, C, H, W = x.shape
    K = w1.shape[2]
    pad = dil * (K // 2)
    mh = mw = pad
    Hp, Wp = H + 2 * mh, W + 2 * mw
    w1_folded = (w1 * scale[:, None, None, None]).reshape(-1)
    kernel = functools.partial(_resblock_kernel, C=C, K=K, dil=dil,
                               H=H, W=W, mh=mh, mw=mw)
    flops = 2 * 2 * N * C * C * K * K * H * W
    bytes_accessed = 4 * (2 * N * C * H * W + 2 * C * C * K * K + C)
    return pl.pallas_call(
        kernel,
        out_shape=jax.ShapeDtypeStruct((N, C, H, W), x.dtype),
        grid=(N,),
        in_specs=[
            pl.BlockSpec((1, C, H, W), lambda n: (n, 0, 0, 0)),
            pl.BlockSpec(memory_space=pltpu.MemorySpace.SMEM),
            pl.BlockSpec(memory_space=pltpu.MemorySpace.SMEM),
            pl.BlockSpec(memory_space=pltpu.MemorySpace.SMEM),
        ],
        out_specs=pl.BlockSpec((1, C, H, W), lambda n: (n, 0, 0, 0)),
        scratch_shapes=[pltpu.VMEM((C, Hp, Wp), jnp.float32),
                        pltpu.VMEM((C, Hp, Wp), jnp.float32)],
        compiler_params=pltpu.CompilerParams(
            dimension_semantics=("parallel",),
            vmem_limit_bytes=_VMEM_LIMIT_BYTES),
        cost_estimate=pl.CostEstimate(flops=flops, transcendentals=0,
                                      bytes_accessed=bytes_accessed),
    )(x, w1_folded, shift, w2.reshape(-1))


def resnet2d_forward(x, proj_w, proj_bn, blocks):
    """blocks: list of (w1, bn_params, w2, dilation)."""
    s, b = _fold_bn(*proj_bn)
    h = conv_bn_relu(x, proj_w, s, b, dil=1)
    for (w1, bn, w2, dil) in blocks:
        s, b = _fold_bn(*bn)
        h = res_block2d(h, w1, s, b, w2, dil=dil)
    return h


# ----------------------------------------------------------------------------
# Pure-JAX reference (for correctness check)
# ----------------------------------------------------------------------------
def _ref_conv(x, w, dil):
    return lax.conv_general_dilated(
        x, w, window_strides=(1, 1), padding="SAME",
        rhs_dilation=(dil, dil),
        dimension_numbers=("NCHW", "OIHW", "NCHW"),
        precision=lax.Precision.HIGHEST)


def ref_forward(x, proj_w, proj_bn, blocks):
    s, b = _fold_bn(*proj_bn)
    h = _ref_conv(x, proj_w, 1)
    h = jnp.maximum(h * s[None, :, None, None] + b[None, :, None, None], 0.0)
    for (w1, bn, w2, dil) in blocks:
        s, b = _fold_bn(*bn)
        t = _ref_conv(h, w1, dil)
        t = jnp.maximum(t * s[None, :, None, None] + b[None, :, None, None], 0.0)
        t = _ref_conv(t, w2, dil)
        h = jnp.maximum(h + t, 0.0)
    return h


# ----------------------------------------------------------------------------
# Demo
# ----------------------------------------------------------------------------
if __name__ == "__main__":
    key = jax.random.PRNGKey(0)
    N, IN_C, OUT_C, H, W = 2, 4, 4, 16, 16
    K, N_BLOCKS = 3, 2
    DILATIONS = [1, 2, 4, 8, 16]

    keys = iter(jax.random.split(key, 32))

    x = jax.random.normal(next(keys), (N, IN_C, H, W), jnp.float32)

    def bn_params(c):
        g = 1.0 + 0.1 * jax.random.normal(next(keys), (c,), jnp.float32)
        b = 0.1 * jax.random.normal(next(keys), (c,), jnp.float32)
        m = 0.1 * jax.random.normal(next(keys), (c,), jnp.float32)
        v = 1.0 + 0.1 * jnp.abs(jax.random.normal(next(keys), (c,), jnp.float32))
        return g, b, m, v

    proj_w = 0.25 * jax.random.normal(next(keys), (OUT_C, IN_C, K, K), jnp.float32)
    proj_bn = bn_params(OUT_C)

    blocks = []
    for i in range(N_BLOCKS):
        w1 = 0.25 * jax.random.normal(next(keys), (OUT_C, OUT_C, K, K), jnp.float32)
        bn = bn_params(OUT_C)
        w2 = 0.25 * jax.random.normal(next(keys), (OUT_C, OUT_C, K, K), jnp.float32)
        blocks.append((w1, bn, w2, DILATIONS[i % len(DILATIONS)]))

    out = resnet2d_forward(x, proj_w, proj_bn, blocks)
    out = jax.block_until_ready(out)

    ref = ref_forward(x, proj_w, proj_bn, blocks)

    assert out.shape == (N, OUT_C, H, W)
    err = float(jnp.max(jnp.abs(out - ref)))
    assert jnp.allclose(out, ref, atol=1e-4, rtol=1e-4), f"max abs err {err}"

    print("KERNEL_OK")
</pallas_src>

<mosaic_0001>
module attributes {stable_mosaic.version = 11 : i64} {
  func.func @_conv_bn_relu_kernel(%arg0: i32, %arg1: memref<1x4x16x16xf32, #tpu.memory_space<vmem>>, %arg2: memref<144xf32, #tpu.memory_space<smem>>, %arg3: memref<4xf32, #tpu.memory_space<smem>>, %arg4: memref<1x4x16x16xf32, #tpu.memory_space<vmem>>, %arg5: memref<4x18x18xf32, #tpu.memory_space<vmem>>) attributes {dimension_semantics = [#tpu.dimension_semantics<parallel>], iteration_bounds = array<i64: 2>, scalar_prefetch = 0 : i64, scratch_operands = 1 : i64, tpu.core_type = #tpu.core_type<tc>, window_params = [{transform_indices = @transform_0, window_bounds = array<i64: 1, 4, 16, 16>}, {transform_indices = @transform_1, window_bounds = array<i64: 144>}, {transform_indices = @transform_2, window_bounds = array<i64: 4>}, {transform_indices = @transform_3, window_bounds = array<i64: 1, 4, 16, 16>}]} {
    %cst = arith.constant 0.000000e+00 : f32
    %0 = vector.broadcast %cst : f32 to vector<4x1x18xf32>
    %c0 = arith.constant 0 : index
    %c0_0 = arith.constant 0 : index
    %c0_1 = arith.constant 0 : index
    %1 = vector.load %arg5[%c0, %c0_0, %c0_1] : memref<4x18x18xf32, #tpu.memory_space<vmem>>, vector<4x1x18xf32>
    tpu.vector_store %arg5[%c0, %c0_0, %c0_1], %0 {strides = array<i32>} : memref<4x18x18xf32, #tpu.memory_space<vmem>>, vector<4x1x18xf32>,
    %cst_2 = arith.constant 0.000000e+00 : f32
    %2 = vector.broadcast %cst_2 : f32 to vector<4x1x18xf32>
    %c0_3 = arith.constant 0 : index
    %c17 = arith.constant 17 : index
    %c0_4 = arith.constant 0 : index
    %3 = vector.load %arg5[%c0_3, %c17, %c0_4] : memref<4x18x18xf32, #tpu.memory_space<vmem>>, vector<4x1x18xf32>
    tpu.vector_store %arg5[%c0_3, %c17, %c0_4], %2 {strides = array<i32>} : memref<4x18x18xf32, #tpu.memory_space<vmem>>, vector<4x1x18xf32>,
    %cst_5 = arith.constant 0.000000e+00 : f32
    %4 = vector.broadcast %cst_5 : f32 to vector<4x16x1xf32>
    %c0_6 = arith.constant 0 : index
    %c1 = arith.constant 1 : index
    %c0_7 = arith.constant 0 : index
    %5 = vector.load %arg5[%c0_6, %c1, %c0_7] : memref<4x18x18xf32, #tpu.memory_space<vmem>>, vector<4x16x1xf32>
    tpu.vector_store %arg5[%c0_6, %c1, %c0_7], %4 {strides = array<i32>} : memref<4x18x18xf32, #tpu.memory_space<vmem>>, vector<4x16x1xf32>,
    %cst_8 = arith.constant 0.000000e+00 : f32
    %6 = vector.broadcast %cst_8 : f32 to vector<4x16x1xf32>
    %c0_9 = arith.constant 0 : index
    %c1_10 = arith.constant 1 : index
    %c17_11 = arith.constant 17 : index
    %7 = vector.load %arg5[%c0_9, %c1_10, %c17_11] : memref<4x18x18xf32, #tpu.memory_space<vmem>>, vector<4x16x1xf32>
    tpu.vector_store %arg5[%c0_9, %c1_10, %c17_11], %6 {strides = array<i32>} : memref<4x18x18xf32, #tpu.memory_space<vmem>>, vector<4x16x1xf32>,
    %c0_12 = arith.constant 0 : index
    %c0_13 = arith.constant 0 : index
    %c0_14 = arith.constant 0 : index
    %c0_15 = arith.constant 0 : index
    %8 = vector.load %arg1[%c0_12, %c0_13, %c0_14, %c0_15] : memref<1x4x16x16xf32, #tpu.memory_space<vmem>>, vector<1x4x16x16xf32>
    %9 = vector.shape_cast %8 : vector<1x4x16x16xf32> to vector<4x16x16xf32>
    %c0_16 = arith.constant 0 : index
    %c1_17 = arith.constant 1 : index
    %c1_18 = arith.constant 1 : index
    %10 = vector.load %arg5[%c0_16, %c1_17, %c1_18] : memref<4x18x18xf32, #tpu.memory_space<vmem>>, vector<4x16x16xf32>
    tpu.vector_store %arg5[%c0_16, %c1_17, %c1_18], %9 {strides = array<i32>} : memref<4x18x18xf32, #tpu.memory_space<vmem>>, vector<4x16x16xf32>,
    %c0_19 = arith.constant 0 : index
    %c0_20 = arith.constant 0 : index
    %c0_21 = arith.constant 0 : index
    %11 = vector.load %arg5[%c0_19, %c0_20, %c0_21] : memref<4x18x18xf32, #tpu.memory_space<vmem>>, vector<1x16x16xf32>
    %12 = vector.shape_cast %11 : vector<1x16x16xf32> to vector<16x16xf32>
    %c0_22 = arith.constant 0 : index
    %13 = memref.load %arg2[%c0_22] : memref<144xf32, #tpu.memory_space<smem>>
    %14 = vector.broadcast %13 : f32 to vector<16x16xf32>
    %15 = arith.mulf %14, %12 : vector<16x16xf32>
    %c36 = arith.constant 36 : index
    %16 = memref.load %arg2[%c36] : memref<144xf32, #tpu.memory_space<smem>>
    %17 = vector.broadcast %16 : f32 to vector<16x16xf32>
    %18 = arith.mulf %17, %12 : vector<16x16xf32>
    %c72 = arith.constant 72 : index
    %19 = memref.load %arg2[%c72] : memref<144xf32, #tpu.memory_space<smem>>
    %20 = vector.broadcast %19 : f32 to vector<16x16xf32>
    %21 = arith.mulf %20, %12 : vector<16x16xf32>
    %c108 = arith.constant 108 : index
    %22 = memref.load %arg2[%c108] : memref<144xf32, #tpu.memory_space<smem>>
    %23 = vector.broadcast %22 : f32 to vector<16x16xf32>
    %24 = arith.mulf %23, %12 : vector<16x16xf32>
    %c0_23 = arith.constant 0 : index
    %c0_24 = arith.constant 0 : index
    %c1_25 = arith.constant 1 : index
    %25 = vector.load %arg5[%c0_23, %c0_24, %c1_25] : memref<4x18x18xf32, #tpu.memory_space<vmem>>, vector<1x16x16xf32>
    %26 = vector.shape_cast %25 : vector<1x16x16xf32> to vector<16x16xf32>
    %c1_26 = arith.constant 1 : index
    %27 = memref.load %arg2[%c1_26] : memref<144xf32, #tpu.memory_space<smem>>
    %28 = vector.broadcast %27 : f32 to vector<16x16xf32>
    %29 = arith.mulf %28, %26 : vector<16x16xf32>
    %c37 = arith.constant 37 : index
    %30 = memref.load %arg2[%c37] : memref<144xf32, #tpu.memory_space<smem>>
    %31 = vector.broadcast %30 : f32 to vector<16x16xf32>
    %32 = arith.mulf %31, %26 : vector<16x16xf32>
    %c73 = arith.constant 73 : index
    %33 = memref.load %arg2[%c73] : memref<144xf32, #tpu.memory_space<smem>>
    %34 = vector.broadcast %33 : f32 to vector<16x16xf32>
    %35 = arith.mulf %34, %26 : vector<16x16xf32>
    %c109 = arith.constant 109 : index
    %36 = memref.load %arg2[%c109] : memref<144xf32, #tpu.memory_space<smem>>
    %37 = vector.broadcast %36 : f32 to vector<16x16xf32>
    %38 = arith.mulf %37, %26 : vector<16x16xf32>
    %c0_27 = arith.constant 0 : index
    %c0_28 = arith.constant 0 : index
    %c2 = arith.constant 2 : index
    %39 = vector.load %arg5[%c0_27, %c0_28, %c2] : memref<4x18x18xf32, #tpu.memory_space<vmem>>, vector<1x16x16xf32>
    %40 = vector.shape_cast %39 : vector<1x16x16xf32> to vector<16x16xf32>
    %c2_29 = arith.constant 2 : index
    %41 = memref.load %arg2[%c2_29] : memref<144xf32, #tpu.memory_space<smem>>
    %42 = vector.broadcast %41 : f32 to vector<16x16xf32>
    %43 = arith.mulf %42, %40 : vector<16x16xf32>
    %44 = arith.addf %15, %43 : vector<16x16xf32>
    %c38 = arith.constant 38 : index
    %45 = memref.load %arg2[%c38] : memref<144xf32, #tpu.memory_space<smem>>
    %46 = vector.broadcast %45 : f32 to vector<16x16xf32>
    %47 = arith.mulf %46, %40 : vector<16x16xf32>
    %48 = arith.addf %18, %47 : vector<16x16xf32>
    %c74 = arith.constant 74 : index
    %49 = memref.load %arg2[%c74] : memref<144xf32, #tpu.memory_space<smem>>
    %50 = vector.broadcast %49 : f32 to vector<16x16xf32>
    %51 = arith.mulf %50, %40 : vector<16x16xf32>
    %52 = arith.addf %21, %51 : vector<16x16xf32>
    %c110 = arith.constant 110 : index
    %53 = memref.load %arg2[%c110] : memref<144xf32, #tpu.memory_space<smem>>
    %54 = vector.broadcast %53 : f32 to vector<16x16xf32>
    %55 = arith.mulf %54, %40 : vector<16x16xf32>
    %56 = arith.addf %24, %55 : vector<16x16xf32>
    %c0_30 = arith.constant 0 : index
    %c1_31 = arith.constant 1 : index
    %c0_32 = arith.constant 0 : index
    %57 = vector.load %arg5[%c0_30, %c1_31, %c0_32] : memref<4x18x18xf32, #tpu.memory_space<vmem>>, vector<1x16x16xf32>
    %58 = vector.shape_cast %57 : vector<1x16x16xf32> to vector<16x16xf32>
    %c3 = arith.constant 3 : index
    %59 = memref.load %arg2[%c3] : memref<144xf32, #tpu.memory_space<smem>>
    %60 = vector.broadcast %59 : f32 to vector<16x16xf32>
    %61 = arith.mulf %60, %58 : vector<16x16xf32>
    %62 = arith.addf %29, %61 : vector<16x16xf32>
    %c39 = arith.constant 39 : index
    %63 = memref.load %arg2[%c39] : memref<144xf32, #tpu.memory_space<smem>>
    %64 = vector.broadcast %63 : f32 to vector<16x16xf32>
    %65 = arith.mulf %64, %58 : vector<16x16xf32>
    %66 = arith.addf %32, %65 : vector<16x16xf32>
    %c75 = arith.constant 75 : index
    %67 = memref.load %arg2[%c75] : memref<144xf32, #tpu.memory_space<smem>>
    %68 = vector.broadcast %67 : f32 to vector<16x16xf32>
    %69 = arith.mulf %68, %58 : vector<16x16xf32>
    %70 = arith.addf %35, %69 : vector<16x16xf32>
    %c111 = arith.constant 111 : index
    %71 = memref.load %arg2[%c111] : memref<144xf32, #tpu.memory_space<smem>>
    %72 = vector.broadcast %71 : f32 to vector<16x16xf32>
    %73 = arith.mulf %72, %58 : vector<16x16xf32>
    %74 = arith.addf %38, %73 : vector<16x16xf32>
    %c0_33 = arith.constant 0 : index
    %c1_34 = arith.constant 1 : index
    %c1_35 = arith.constant 1 : index
    %75 = vector.load %arg5[%c0_33, %c1_34, %c1_35] : memref<4x18x18xf32, #tpu.memory_space<vmem>>, vector<1x16x16xf32>
    %76 = vector.shape_cast %75 : vector<1x16x16xf32> to vector<16x16xf32>
    %c4 = arith.constant 4 : index
    %77 = memref.load %arg2[%c4] : memref<144xf32, #tpu.memory_space<smem>>
    %78 = vector.broadcast %77 : f32 to vector<16x16xf32>
    %79 = arith.mulf %78, %76 : vector<16x16xf32>
    %80 = arith.addf %44, %79 : vector<16x16xf32>
    %c40 = arith.constant 40 : index
    %81 = memref.load %arg2[%c40] : memref<144xf32, #tpu.memory_space<smem>>
    %82 = vector.broadcast %81 : f32 to vector<16x16xf32>
    %83 = arith.mulf %82, %76 : vector<16x16xf32>
    %84 = arith.addf %48, %83 : vector<16x16xf32>
    %c76 = arith.constant 76 : index
    %85 = memref.load %arg2[%c76] : memref<144xf32, #tpu.memory_space<smem>>
    %86 = vector.broadcast %85 : f32 to vector<16x16xf32>
    %87 = arith.mulf %86, %76 : vector<16x16xf32>
    %88 = arith.addf %52, %87 : vector<16x16xf32>
    %c112 = arith.constant 112 : index
    %89 = memref.load %arg2[%c112] : memref<144xf32, #tpu.memory_space<smem>>
    %90 = vector.broadcast %89 : f32 to vector<16x16xf32>
    %91 = arith.mulf %90, %76 : vector<16x16xf32>
    %92 = arith.addf %56, %91 : vector<16x16xf32>
    %c0_36 = arith.constant 0 : index
    %c1_37 = arith.constant 1 : index
    %c2_38 = arith.constant 2 : index
    %93 = vector.load %arg5[%c0_36, %c1_37, %c2_38] : memref<4x18x18xf32, #tpu.memory_space<vmem>>, vector<1x16x16xf32>
    %94 = vector.shape_cast %93 : vector<1x16x16xf32> to vector<16x16xf32>
    %c5 = arith.constant 5 : index
    %95 = memref.load %arg2[%c5] : memref<144xf32, #tpu.memory_space<smem>>
    %96 = vector.broadcast %95 : f32 to vector<16x16xf32>
    %97 = arith.mulf %96, %94 : vector<16x16xf32>
    %98 = arith.addf %62, %97 : vector<16x16xf32>
    %c41 = arith.constant 41 : index
    %99 = memref.load %arg2[%c41] : memref<144xf32, #tpu.memory_space<smem>>
    %100 = vector.broadcast %99 : f32 to vector<16x16xf32>
    %101 = arith.mulf %100, %94 : vector<16x16xf32>
    %102 = arith.addf %66, %101 : vector<16x16xf32>
    %c77 = arith.constant 77 : index
    %103 = memref.load %arg2[%c77] : memref<144xf32, #tpu.memory_space<smem>>
    %104 = vector.broadcast %103 : f32 to vector<16x16xf32>
    %105 = arith.mulf %104, %94 : vector<16x16xf32>
    %106 = arith.addf %70, %105 : vector<16x16xf32>
    %c113 = arith.constant 113 : index
    %107 = memref.load %arg2[%c113] : memref<144xf32, #tpu.memory_space<smem>>
    %108 = vector.broadcast %107 : f32 to vector<16x16xf32>
    %109 = arith.mulf %108, %94 : vector<16x16xf32>
    %110 = arith.addf %74, %109 : vector<16x16xf32>
    %c0_39 = arith.constant 0 : index
    %c2_40 = arith.constant 2 : index
    %c0_41 = arith.constant 0 : index
    %111 = vector.load %arg5[%c0_39, %c2_40, %c0_41] : memref<4x18x18xf32, #tpu.memory_space<vmem>>, vector<1x16x16xf32>
    %112 = vector.shape_cast %111 : vector<1x16x16xf32> to vector<16x16xf32>
    %c6 = arith.constant 6 : index
    %113 = memref.load %arg2[%c6] : memref<144xf32, #tpu.memory_space<smem>>
    %114 = vector.broadcast %113 : f32 to vector<16x16xf32>
    %115 = arith.mulf %114, %112 : vector<16x16xf32>
    %116 = arith.addf %80, %115 : vector<16x16xf32>
    %c42 = arith.constant 42 : index
    %117 = memref.load %arg2[%c42] : memref<144xf32, #tpu.memory_space<smem>>
    %118 = vector.broadcast %117 : f32 to vector<16x16xf32>
    %119 = arith.mulf %118, %112 : vector<16x16xf32>
    %120 = arith.addf %84, %119 : vector<16x16xf32>
    %c78 = arith.constant 78 : index
    %121 = memref.load %arg2[%c78] : memref<144xf32, #tpu.memory_space<smem>>
    %122 = vector.broadcast %121 : f32 to vector<16x16xf32>
    %123 = arith.mulf %122, %112 : vector<16x16xf32>
    %124 = arith.addf %88, %123 : vector<16x16xf32>
    %c114 = arith.constant 114 : index
    %125 = memref.load %arg2[%c114] : memref<144xf32, #tpu.memory_space<smem>>
    %126 = vector.broadcast %125 : f32 to vector<16x16xf32>
    %127 = arith.mulf %126, %112 : vector<16x16xf32>
    %128 = arith.addf %92, %127 : vector<16x16xf32>
    %c0_42 = arith.constant 0 : index
    %c2_43 = arith.constant 2 : index
    %c1_44 = arith.constant 1 : index
    %129 = vector.load %arg5[%c0_42, %c2_43, %c1_44] : memref<4x18x18xf32, #tpu.memory_space<vmem>>, vector<1x16x16xf32>
    %130 = vector.shape_cast %129 : vector<1x16x16xf32> to vector<16x16xf32>
    %c7 = arith.constant 7 : index
    %131 = memref.load %arg2[%c7] : memref<144xf32, #tpu.memory_space<smem>>
    %132 = vector.broadcast %131 : f32 to vector<16x16xf32>
    %133 = arith.mulf %132, %130 : vector<16x16xf32>
    %134 = arith.addf %98, %133 : vector<16x16xf32>
    %c43 = arith.constant 43 : index
    %135 = memref.load %arg2[%c43] : memref<144xf32, #tpu.memory_space<smem>>
    %136 = vector.broadcast %135 : f32 to vector<16x16xf32>
    %137 = arith.mulf %136, %130 : vector<16x16xf32>
    %138 = arith.addf %102, %137 : vector<16x16xf32>
    %c79 = arith.constant 79 : index
    %139 = memref.load %arg2[%c79] : memref<144xf32, #tpu.memory_space<smem>>
    %140 = vector.broadcast %139 : f32 to vector<16x16xf32>
    %141 = arith.mulf %140, %130 : vector<16x16xf32>
    %142 = arith.addf %106, %141 : vector<16x16xf32>
    %c115 = arith.constant 115 : index
    %143 = memref.load %arg2[%c115] : memref<144xf32, #tpu.memory_space<smem>>
    %144 = vector.broadcast %143 : f32 to vector<16x16xf32>
    %145 = arith.mulf %144, %130 : vector<16x16xf32>
    %146 = arith.addf %110, %145 : vector<16x16xf32>
    %c0_45 = arith.constant 0 : index
    %c2_46 = arith.constant 2 : index
    %c2_47 = arith.constant 2 : index
    %147 = vector.load %arg5[%c0_45, %c2_46, %c2_47] : memref<4x18x18xf32, #tpu.memory_space<vmem>>, vector<1x16x16xf32>
    %148 = vector.shape_cast %147 : vector<1x16x16xf32> to vector<16x16xf32>
    %c8 = arith.constant 8 : index
    %149 = memref.load %arg2[%c8] : memref<144xf32, #tpu.memory_space<smem>>
    %150 = vector.broadcast %149 : f32 to vector<16x16xf32>
    %151 = arith.mulf %150, %148 : vector<16x16xf32>
    %152 = arith.addf %116, %151 : vector<16x16xf32>
    %c44 = arith.constant 44 : index
    %153 = memref.load %arg2[%c44] : memref<144xf32, #tpu.memory_space<smem>>
    %154 = vector.broadcast %153 : f32 to vector<16x16xf32>
    %155 = arith.mulf %154, %148 : vector<16x16xf32>
    %156 = arith.addf %120, %155 : vector<16x16xf32>
    %c80 = arith.constant 80 : index
    %157 = memref.load %arg2[%c80] : memref<144xf32, #tpu.memory_space<smem>>
    %158 = vector.broadcast %157 : f32 to vector<16x16xf32>
    %159 = arith.mulf %158, %148 : vector<16x16xf32>
    %160 = arith.addf %124, %159 : vector<16x16xf32>
    %c116 = arith.constant 116 : index
    %161 = memref.load %arg2[%c116] : memref<144xf32, #tpu.memory_space<smem>>
    %162 = vector.broadcast %161 : f32 to vector<16x16xf32>
    %163 = arith.mulf %162, %148 : vector<16x16xf32>
    %164 = arith.addf %128, %163 : vector<16x16xf32>
    %c1_48 = arith.constant 1 : index
    %c0_49 = arith.constant 0 : index
    %c0_50 = arith.constant 0 : index
    %165 = vector.load %arg5[%c1_48, %c0_49, %c0_50] : memref<4x18x18xf32, #tpu.memory_space<vmem>>, vector<1x16x16xf32>
    %166 = vector.shape_cast %165 : vector<1x16x16xf32> to vector<16x16xf32>
    %c9 = arith.constant 9 : index
    %167 = memref.load %arg2[%c9] : memref<144xf32, #tpu.memory_space<smem>>
    %168 = vector.broadcast %167 : f32 to vector<16x16xf32>
    %169 = arith.mulf %168, %166 : vector<16x16xf32>
    %170 = arith.addf %134, %169 : vector<16x16xf32>
    %c45 = arith.constant 45 : index
    %171 = memref.load %arg2[%c45] : memref<144xf32, #tpu.memory_space<smem>>
    %172 = vector.broadcast %171 : f32 to vector<16x16xf32>
    %173 = arith.mulf %172, %166 : vector<16x16xf32>
    %174 = arith.addf %138, %173 : vector<16x16xf32>
    %c81 = arith.constant 81 : index
    %175 = memref.load %arg2[%c81] : memref<144xf32, #tpu.memory_space<smem>>
    %176 = vector.broadcast %175 : f32 to vector<16x16xf32>
    %177 = arith.mulf %176, %166 : vector<16x16xf32>
    %178 = arith.addf %142, %177 : vector<16x16xf32>
    %c117 = arith.constant 117 : index
    %179 = memref.load %arg2[%c117] : memref<144xf32, #tpu.memory_space<smem>>
    %180 = vector.broadcast %179 : f32 to vector<16x16xf32>
    %181 = arith.mulf %180, %166 : vector<16x16xf32>
    %182 = arith.addf %146, %181 : vector<16x16xf32>
    %c1_51 = arith.constant 1 : index
    %c0_52 = arith.constant 0 : index
    %c1_53 = arith.constant 1 : index
    %183 = vector.load %arg5[%c1_51, %c0_52, %c1_53] : memref<4x18x18xf32, #tpu.memory_space<vmem>>, vector<1x16x16xf32>
    %184 = vector.shape_cast %183 : vector<1x16x16xf32> to vector<16x16xf32>
    %c10 = arith.constant 10 : index
    %185 = memref.load %arg2[%c10] : memref<144xf32, #tpu.memory_space<smem>>
    %186 = vector.broadcast %185 : f32 to vector<16x16xf32>
    %187 = arith.mulf %186, %184 : vector<16x16xf32>
    %188 = arith.addf %152, %187 : vector<16x16xf32>
    %c46 = arith.constant 46 : index
    %189 = memref.load %arg2[%c46] : memref<144xf32, #tpu.memory_space<smem>>
    %190 = vector.broadcast %189 : f32 to vector<16x16xf32>
    %191 = arith.mulf %190, %184 : vector<16x16xf32>
    %192 = arith.addf %156, %191 : vector<16x16xf32>
    %c82 = arith.constant 82 : index
    %193 = memref.load %arg2[%c82] : memref<144xf32, #tpu.memory_space<smem>>
    %194 = vector.broadcast %193 : f32 to vector<16x16xf32>
    %195 = arith.mulf %194, %184 : vector<16x16xf32>
    %196 = arith.addf %160, %195 : vector<16x16xf32>
    %c118 = arith.constant 118 : index
    %197 = memref.load %arg2[%c118] : memref<144xf32, #tpu.memory_space<smem>>
    %198 = vector.broadcast %197 : f32 to vector<16x16xf32>
    %199 = arith.mulf %198, %184 : vector<16x16xf32>
    %200 = arith.addf %164, %199 : vector<16x16xf32>
    %c1_54 = arith.constant 1 : index
    %c0_55 = arith.constant 0 : index
    %c2_56 = arith.constant 2 : index
    %201 = vector.load %arg5[%c1_54, %c0_55, %c2_56] : memref<4x18x18xf32, #tpu.memory_space<vmem>>, vector<1x16x16xf32>
    %202 = vector.shape_cast %201 : vector<1x16x16xf32> to vector<16x16xf32>
    %c11 = arith.constant 11 : index
    %203 = memref.load %arg2[%c11] : memref<144xf32, #tpu.memory_space<smem>>
    %204 = vector.broadcast %203 : f32 to vector<16x16xf32>
    %205 = arith.mulf %204, %202 : vector<16x16xf32>
    %206 = arith.addf %170, %205 : vector<16x16xf32>
    %c47 = arith.constant 47 : index
    %207 = memref.load %arg2[%c47] : memref<144xf32, #tpu.memory_space<smem>>
    %208 = vector.broadcast %207 : f32 to vector<16x16xf32>
    %209 = arith.mulf %208, %202 : vector<16x16xf32>
    %210 = arith.addf %174, %209 : vector<16x16xf32>
    %c83 = arith.constant 83 : index
    %211 = memref.load %arg2[%c83] : memref<144xf32, #tpu.memory_space<smem>>
    %212 = vector.broadcast %211 : f32 to vector<16x16xf32>
    %213 = arith.mulf %212, %202 : vector<16x16xf32>
    %214 = arith.addf %178, %213 : vector<16x16xf32>
    %c119 = arith.constant 119 : index
    %215 = memref.load %arg2[%c119] : memref<144xf32, #tpu.memory_space<smem>>
    %216 = vector.broadcast %215 : f32 to vector<16x16xf32>
    %217 = arith.mulf %216, %202 : vector<16x16xf32>
    %218 = arith.addf %182, %217 : vector<16x16xf32>
    %c1_57 = arith.constant 1 : index
    %c1_58 = arith.constant 1 : index
    %c0_59 = arith.constant 0 : index
    %219 = vector.load %arg5[%c1_57, %c1_58, %c0_59] : memref<4x18x18xf32, #tpu.memory_space<vmem>>, vector<1x16x16xf32>
    %220 = vector.shape_cast %219 : vector<1x16x16xf32> to vector<16x16xf32>
    %c12 = arith.constant 12 : index
    %221 = memref.load %arg2[%c12] : memref<144xf32, #tpu.memory_space<smem>>
    %222 = vector.broadcast %221 : f32 to vector<16x16xf32>
    %223 = arith.mulf %222, %220 : vector<16x16xf32>
    %224 = arith.addf %188, %223 : vector<16x16xf32>
    %c48 = arith.constant 48 : index
    %225 = memref.load %arg2[%c48] : memref<144xf32, #tpu.memory_space<smem>>
    %226 = vector.broadcast %225 : f32 to vector<16x16xf32>
    %227 = arith.mulf %226, %220 : vector<16x16xf32>
    %228 = arith.addf %192, %227 : vector<16x16xf32>
    %c84 = arith.constant 84 : index
    %229 = memref.load %arg2[%c84] : memref<144xf32, #tpu.memory_space<smem>>
    %230 = vector.broadcast %229 : f32 to vector<16x16xf32>
    %231 = arith.mulf %230, %220 : vector<16x16xf32>
    %232 = arith.addf %196, %231 : vector<16x16xf32>
    %c120 = arith.constant 120 : index
    %233 = memref.load %arg2[%c120] : memref<144xf32, #tpu.memory_space<smem>>
    %234 = vector.broadcast %233 : f32 to vector<16x16xf32>
    %235 = arith.mulf %234, %220 : vector<16x16xf32>
    %236 = arith.addf %200, %235 : vector<16x16xf32>
    %c1_60 = arith.constant 1 : index
    %c1_61 = arith.constant 1 : index
    %c1_62 = arith.constant 1 : index
    %237 = vector.load %arg5[%c1_60, %c1_61, %c1_62] : memref<4x18x18xf32, #tpu.memory_space<vmem>>, vector<1x16x16xf32>
    %238 = vector.shape_cast %237 : vector<1x16x16xf32> to vector<16x16xf32>
    %c13 = arith.constant 13 : index
    %239 = memref.load %arg2[%c13] : memref<144xf32, #tpu.memory_space<smem>>
    %240 = vector.broadcast %239 : f32 to vector<16x16xf32>
    %241 = arith.mulf %240, %238 : vector<16x16xf32>
    %242 = arith.addf %206, %241 : vector<16x16xf32>
    %c49 = arith.constant 49 : index
    %243 = memref.load %arg2[%c49] : memref<144xf32, #tpu.memory_space<smem>>
    %244 = vector.broadcast %243 : f32 to vector<16x16xf32>
    %245 = arith.mulf %244, %238 : vector<16x16xf32>
    %246 = arith.addf %210, %245 : vector<16x16xf32>
    %c85 = arith.constant 85 : index
    %247 = memref.load %arg2[%c85] : memref<144xf32, #tpu.memory_space<smem>>
    %248 = vector.broadcast %247 : f32 to vector<16x16xf32>
    %249 = arith.mulf %248, %238 : vector<16x16xf32>
    %250 = arith.addf %214, %249 : vector<16x16xf32>
    %c121 = arith.constant 121 : index
    %251 = memref.load %arg2[%c121] : memref<144xf32, #tpu.memory_space<smem>>
    %252 = vector.broadcast %251 : f32 to vector<16x16xf32>
    %253 = arith.mulf %252, %238 : vector<16x16xf32>
    %254 = arith.addf %218, %253 : vector<16x16xf32>
    %c1_63 = arith.constant 1 : index
    %c1_64 = arith.constant 1 : index
    %c2_65 = arith.constant 2 : index
    %255 = vector.load %arg5[%c1_63, %c1_64, %c2_65] : memref<4x18x18xf32, #tpu.memory_space<vmem>>, vector<1x16x16xf32>
    %256 = vector.shape_cast %255 : vector<1x16x16xf32> to vector<16x16xf32>
    %c14 = arith.constant 14 : index
    %257 = memref.load %arg2[%c14] : memref<144xf32, #tpu.memory_space<smem>>
    %258 = vector.broadcast %257 : f32 to vector<16x16xf32>
    %259 = arith.mulf %258, %256 : vector<16x16xf32>
    %260 = arith.addf %224, %259 : vector<16x16xf32>
    %c50 = arith.constant 50 : index
    %261 = memref.load %arg2[%c50] : memref<144xf32, #tpu.memory_space<smem>>
    %262 = vector.broadcast %261 : f32 to vector<16x16xf32>
    %263 = arith.mulf %262, %256 : vector<16x16xf32>
    %264 = arith.addf %228, %263 : vector<16x16xf32>
    %c86 = arith.constant 86 : index
    %265 = memref.load %arg2[%c86] : memref<144xf32, #tpu.memory_space<smem>>
    %266 = vector.broadcast %265 : f32 to vector<16x16xf32>
    %267 = arith.mulf %266, %256 : vector<16x16xf32>
    %268 = arith.addf %232, %267 : vector<16x16xf32>
    %c122 = arith.constant 122 : index
    %269 = memref.load %arg2[%c122] : memref<144xf32, #tpu.memory_space<smem>>
    %270 = vector.broadcast %269 : f32 to vector<16x16xf32>
    %271 = arith.mulf %270, %256 : vector<16x16xf32>
    %272 = arith.addf %236, %271 : vector<16x16xf32>
    %c1_66 = arith.constant 1 : index
    %c2_67 = arith.constant 2 : index
    %c0_68 = arith.constant 0 : index
    %273 = vector.load %arg5[%c1_66, %c2_67, %c0_68] : memref<4x18x18xf32, #tpu.memory_space<vmem>>, vector<1x16x16xf32>
    %274 = vector.shape_cast %273 : vector<1x16x16xf32> to vector<16x16xf32>
    %c15 = arith.constant 15 : index
    %275 = memref.load %arg2[%c15] : memref<144xf32, #tpu.memory_space<smem>>
    %276 = vector.broadcast %275 : f32 to vector<16x16xf32>
    %277 = arith.mulf %276, %274 : vector<16x16xf32>
    %278 = arith.addf %242, %277 : vector<16x16xf32>
    %c51 = arith.constant 51 : index
    %279 = memref.load %arg2[%c51] : memref<144xf32, #tpu.memory_space<smem>>
    %280 = vector.broadcast %279 : f32 to vector<16x16xf32>
    %281 = arith.mulf %280, %274 : vector<16x16xf32>
    %282 = arith.addf %246, %281 : vector<16x16xf32>
    %c87 = arith.constant 87 : index
    %283 = memref.load %arg2[%c87] : memref<144xf32, #tpu.memory_space<smem>>
    %284 = vector.broadcast %283 : f32 to vector<16x16xf32>
    %285 = arith.mulf %284, %274 : vector<16x16xf32>
    %286 = arith.addf %250, %285 : vector<16x16xf32>
    %c123 = arith.constant 123 : index
    %287 = memref.load %arg2[%c123] : memref<144xf32, #tpu.memory_space<smem>>
    %288 = vector.broadcast %287 : f32 to vector<16x16xf32>
    %289 = arith.mulf %288, %274 : vector<16x16xf32>
    %290 = arith.addf %254, %289 : vector<16x16xf32>
    %c1_69 = arith.constant 1 : index
    %c2_70 = arith.constant 2 : index
    %c1_71 = arith.constant 1 : index
    %291 = vector.load %arg5[%c1_69, %c2_70, %c1_71] : memref<4x18x18xf32, #tpu.memory_space<vmem>>, vector<1x16x16xf32>
    %292 = vector.shape_cast %291 : vector<1x16x16xf32> to vector<16x16xf32>
    %c16 = arith.constant 16 : index
    %293 = memref.load %arg2[%c16] : memref<144xf32, #tpu.memory_space<smem>>
    %294 = vector.broadcast %293 : f32 to vector<16x16xf32>
    %295 = arith.mulf %294, %292 : vector<16x16xf32>
    %296 = arith.addf %260, %295 : vector<16x16xf32>
    %c52 = arith.constant 52 : index
    %297 = memref.load %arg2[%c52] : memref<144xf32, #tpu.memory_space<smem>>
    %298 = vector.broadcast %297 : f32 to vector<16x16xf32>
    %299 = arith.mulf %298, %292 : vector<16x16xf32>
    %300 = arith.addf %264, %299 : vector<16x16xf32>
    %c88 = arith.constant 88 : index
    %301 = memref.load %arg2[%c88] : memref<144xf32, #tpu.memory_space<smem>>
    %302 = vector.broadcast %301 : f32 to vector<16x16xf32>
    %303 = arith.mulf %302, %292 : vector<16x16xf32>
    %304 = arith.addf %268, %303 : vector<16x16xf32>
    %c124 = arith.constant 124 : index
    %305 = memref.load %arg2[%c124] : memref<144xf32, #tpu.memory_space<smem>>
    %306 = vector.broadcast %305 : f32 to vector<16x16xf32>
    %307 = arith.mulf %306, %292 : vector<16x16xf32>
    %308 = arith.addf %272, %307 : vector<16x16xf32>
    %c1_72 = arith.constant 1 : index
    %c2_73 = arith.constant 2 : index
    %c2_74 = arith.constant 2 : index
    %309 = vector.load %arg5[%c1_72, %c2_73, %c2_74] : memref<4x18x18xf32, #tpu.memory_space<vmem>>, vector<1x16x16xf32>
    %310 = vector.shape_cast %309 : vector<1x16x16xf32> to vector<16x16xf32>
    %c17_75 = arith.constant 17 : index
    %311 = memref.load %arg2[%c17_75] : memref<144xf32, #tpu.memory_space<smem>>
    %312 = vector.broadcast %311 : f32 to vector<16x16xf32>
    %313 = arith.mulf %312, %310 : vector<16x16xf32>
    %314 = arith.addf %278, %313 : vector<16x16xf32>
    %c53 = arith.constant 53 : index
    %315 = memref.load %arg2[%c53] : memref<144xf32, #tpu.memory_space<smem>>
    %316 = vector.broadcast %315 : f32 to vector<16x16xf32>
    %317 = arith.mulf %316, %310 : vector<16x16xf32>
    %318 = arith.addf %282, %317 : vector<16x16xf32>
    %c89 = arith.constant 89 : index
    %319 = memref.load %arg2[%c89] : memref<144xf32, #tpu.memory_space<smem>>
    %320 = vector.broadcast %319 : f32 to vector<16x16xf32>
    %321 = arith.mulf %320, %310 : vector<16x16xf32>
    %322 = arith.addf %286, %321 : vector<16x16xf32>
    %c125 = arith.constant 125 : index
    %323 = memref.load %arg2[%c125] : memref<144xf32, #tpu.memory_space<smem>>
    %324 = vector.broadcast %323 : f32 to vector<16x16xf32>
    %325 = arith.mulf %324, %310 : vector<16x16xf32>
    %326 = arith.addf %290, %325 : vector<16x16xf32>
    %c2_76 = arith.constant 2 : index
    %c0_77 = arith.constant 0 : index
    %c0_78 = arith.constant 0 : index
    %327 = vector.load %arg5[%c2_76, %c0_77, %c0_78] : memref<4x18x18xf32, #tpu.memory_space<vmem>>, vector<1x16x16xf32>
    %328 = vector.shape_cast %327 : vector<1x16x16xf32> to vector<16x16xf32>
    %c18 = arith.constant 18 : index
    %329 = memref.load %arg2[%c18] : memref<144xf32, #tpu.memory_space<smem>>
    %330 = vector.broadcast %329 : f32 to vector<16x16xf32>
    %331 = arith.mulf %330, %328 : vector<16x16xf32>
    %332 = arith.addf %296, %331 : vector<16x16xf32>
    %c54 = arith.constant 54 : index
    %333 = memref.load %arg2[%c54] : memref<144xf32, #tpu.memory_space<smem>>
    %334 = vector.broadcast %333 : f32 to vector<16x16xf32>
    %335 = arith.mulf %334, %328 : vector<16x16xf32>
    %336 = arith.addf %300, %335 : vector<16x16xf32>
    %c90 = arith.constant 90 : index
    %337 = memref.load %arg2[%c90] : memref<144xf32, #tpu.memory_space<smem>>
    %338 = vector.broadcast %337 : f32 to vector<16x16xf32>
    %339 = arith.mulf %338, %328 : vector<16x16xf32>
    %340 = arith.addf %304, %339 : vector<16x16xf32>
    %c126 = arith.constant 126 : index
    %341 = memref.load %arg2[%c126] : memref<144xf32, #tpu.memory_space<smem>>
    %342 = vector.broadcast %341 : f32 to vector<16x16xf32>
    %343 = arith.mulf %342, %328 : vector<16x16xf32>
    %344 = arith.addf %308, %343 : vector<16x16xf32>
    %c2_79 = arith.constant 2 : index
    %c0_80 = arith.constant 0 : index
    %c1_81 = arith.constant 1 : index
    %345 = vector.load %arg5[%c2_79, %c0_80, %c1_81] : memref<4x18x18xf32, #tpu.memory_space<vmem>>, vector<1x16x16xf32>
    %346 = vector.shape_cast %345 : vector<1x16x16xf32> to vector<16x16xf32>
    %c19 = arith.constant 19 : index
    %347 = memref.load %arg2[%c19] : memref<144xf32, #tpu.memory_space<smem>>
    %348 = vector.broadcast %347 : f32 to vector<16x16xf32>
    %349 = arith.mulf %348, %346 : vector<16x16xf32>
    %350 = arith.addf %314, %349 : vector<16x16xf32>
    %c55 = arith.constant 55 : index
    %351 = memref.load %arg2[%c55] : memref<144xf32, #tpu.memory_space<smem>>
    %352 = vector.broadcast %351 : f32 to vector<16x16xf32>
    %353 = arith.mulf %352, %346 : vector<16x16xf32>
    %354 = arith.addf %318, %353 : vector<16x16xf32>
    %c91 = arith.constant 91 : index
    %355 = memref.load %arg2[%c91] : memref<144xf32, #tpu.memory_space<smem>>
    %356 = vector.broadcast %355 : f32 to vector<16x16xf32>
    %357 = arith.mulf %356, %346 : vector<16x16xf32>
    %358 = arith.addf %322, %357 : vector<16x16xf32>
    %c127 = arith.constant 127 : index
    %359 = memref.load %arg2[%c127] : memref<144xf32, #tpu.memory_space<smem>>
    %360 = vector.broadcast %359 : f32 to vector<16x16xf32>
    %361 = arith.mulf %360, %346 : vector<16x16xf32>
    %362 = arith.addf %326, %361 : vector<16x16xf32>
    %c2_82 = arith.constant 2 : index
    %c0_83 = arith.constant 0 : index
    %c2_84 = arith.constant 2 : index
    %363 = vector.load %arg5[%c2_82, %c0_83, %c2_84] : memref<4x18x18xf32, #tpu.memory_space<vmem>>, vector<1x16x16xf32>
    %364 = vector.shape_cast %363 : vector<1x16x16xf32> to vector<16x16xf32>
    %c20 = arith.constant 20 : index
    %365 = memref.load %arg2[%c20] : memref<144xf32, #tpu.memory_space<smem>>
    %366 = vector.broadcast %365 : f32 to vector<16x16xf32>
    %367 = arith.mulf %366, %364 : vector<16x16xf32>
    %368 = arith.addf %332, %367 : vector<16x16xf32>
    %c56 = arith.constant 56 : index
    %369 = memref.load %arg2[%c56] : memref<144xf32, #tpu.memory_space<smem>>
    %370 = vector.broadcast %369 : f32 to vector<16x16xf32>
    %371 = arith.mulf %370, %364 : vector<16x16xf32>
    %372 = arith.addf %336, %371 : vector<16x16xf32>
    %c92 = arith.constant 92 : index
    %373 = memref.load %arg2[%c92] : memref<144xf32, #tpu.memory_space<smem>>
    %374 = vector.broadcast %373 : f32 to vector<16x16xf32>
    %375 = arith.mulf %374, %364 : vector<16x16xf32>
    %376 = arith.addf %340, %375 : vector<16x16xf32>
    %c128 = arith.constant 128 : index
    %377 = memref.load %arg2[%c128] : memref<144xf32, #tpu.memory_space<smem>>
    %378 = vector.broadcast %377 : f32 to vector<16x16xf32>
    %379 = arith.mulf %378, %364 : vector<16x16xf32>
    %380 = arith.addf %344, %379 : vector<16x16xf32>
    %c2_85 = arith.constant 2 : index
    %c1_86 = arith.constant 1 : index
    %c0_87 = arith.constant 0 : index
    %381 = vector.load %arg5[%c2_85, %c1_86, %c0_87] : memref<4x18x18xf32, #tpu.memory_space<vmem>>, vector<1x16x16xf32>
    %382 = vector.shape_cast %381 : vector<1x16x16xf32> to vector<16x16xf32>
    %c21 = arith.constant 21 : index
    %383 = memref.load %arg2[%c21] : memref<144xf32, #tpu.memory_space<smem>>
    %384 = vector.broadcast %383 : f32 to vector<16x16xf32>
    %385 = arith.mulf %384, %382 : vector<16x16xf32>
    %386 = arith.addf %350, %385 : vector<16x16xf32>
    %c57 = arith.constant 57 : index
    %387 = memref.load %arg2[%c57] : memref<144xf32, #tpu.memory_space<smem>>
    %388 = vector.broadcast %387 : f32 to vector<16x16xf32>
    %389 = arith.mulf %388, %382 : vector<16x16xf32>
    %390 = arith.addf %354, %389 : vector<16x16xf32>
    %c93 = arith.constant 93 : index
    %391 = memref.load %arg2[%c93] : memref<144xf32, #tpu.memory_space<smem>>
    %392 = vector.broadcast %391 : f32 to vector<16x16xf32>
    %393 = arith.mulf %392, %382 : vector<16x16xf32>
    %394 = arith.addf %358, %393 : vector<16x16xf32>
    %c129 = arith.constant 129 : index
    %395 = memref.load %arg2[%c129] : memref<144xf32, #tpu.memory_space<smem>>
    %396 = vector.broadcast %395 : f32 to vector<16x16xf32>
    %397 = arith.mulf %396, %382 : vector<16x16xf32>
    %398 = arith.addf %362, %397 : vector<16x16xf32>
    %c2_88 = arith.constant 2 : index
    %c1_89 = arith.constant 1 : index
    %c1_90 = arith.constant 1 : index
    %399 = vector.load %arg5[%c2_88, %c1_89, %c1_90] : memref<4x18x18xf32, #tpu.memory_space<vmem>>, vector<1x16x16xf32>
    %400 = vector.shape_cast %399 : vector<1x16x16xf32> to vector<16x16xf32>
    %c22 = arith.constant 22 : index
    %401 = memref.load %arg2[%c22] : memref<144xf32, #tpu.memory_space<smem>>
    %402 = vector.broadcast %401 : f32 to vector<16x16xf32>
    %403 = arith.mulf %402, %400 : vector<16x16xf32>
    %404 = arith.addf %368, %403 : vector<16x16xf32>
    %c58 = arith.constant 58 : index
    %405 = memref.load %arg2[%c58] : memref<144xf32, #tpu.memory_space<smem>>
    %406 = vector.broadcast %405 : f32 to vector<16x16xf32>
    %407 = arith.mulf %406, %400 : vector<16x16xf32>
    %408 = arith.addf %372, %407 : vector<16x16xf32>
    %c94 = arith.constant 94 : index
    %409 = memref.load %arg2[%c94] : memref<144xf32, #tpu.memory_space<smem>>
    %410 = vector.broadcast %409 : f32 to vector<16x16xf32>
    %411 = arith.mulf %410, %400 : vector<16x16xf32>
    %412 = arith.addf %376, %411 : vector<16x16xf32>
    %c130 = arith.constant 130 : index
    %413 = memref.load %arg2[%c130] : memref<144xf32, #tpu.memory_space<smem>>
    %414 = vector.broadcast %413 : f32 to vector<16x16xf32>
    %415 = arith.mulf %414, %400 : vector<16x16xf32>
    %416 = arith.addf %380, %415 : vector<16x16xf32>
    %c2_91 = arith.constant 2 : index
    %c1_92 = arith.constant 1 : index
    %c2_93 = arith.constant 2 : index
    %417 = vector.load %arg5[%c2_91, %c1_92, %c2_93] : memref<4x18x18xf32, #tpu.memory_space<vmem>>, vector<1x16x16xf32>
    %418 = vector.shape_cast %417 : vector<1x16x16xf32> to vector<16x16xf32>
    %c23 = arith.constant 23 : index
    %419 = memref.load %arg2[%c23] : memref<144xf32, #tpu.memory_space<smem>>
    %420 = vector.broadcast %419 : f32 to vector<16x16xf32>
    %421 = arith.mulf %420, %418 : vector<16x16xf32>
    %422 = arith.addf %386, %421 : vector<16x16xf32>
    %c59 = arith.constant 59 : index
    %423 = memref.load %arg2[%c59] : memref<144xf32, #tpu.memory_space<smem>>
    %424 = vector.broadcast %423 : f32 to vector<16x16xf32>
    %425 = arith.mulf %424, %418 : vector<16x16xf32>
    %426 = arith.addf %390, %425 : vector<16x16xf32>
    %c95 = arith.constant 95 : index
    %427 = memref.load %arg2[%c95] : memref<144xf32, #tpu.memory_space<smem>>
    %428 = vector.broadcast %427 : f32 to vector<16x16xf32>
    %429 = arith.mulf %428, %418 : vector<16x16xf32>
    %430 = arith.addf %394, %429 : vector<16x16xf32>
    %c131 = arith.constant 131 : index
    %431 = memref.load %arg2[%c131] : memref<144xf32, #tpu.memory_space<smem>>
    %432 = vector.broadcast %431 : f32 to vector<16x16xf32>
    %433 = arith.mulf %432, %418 : vector<16x16xf32>
    %434 = arith.addf %398, %433 : vector<16x16xf32>
    %c2_94 = arith.constant 2 : index
    %c2_95 = arith.constant 2 : index
    %c0_96 = arith.constant 0 : index
    %435 = vector.load %arg5[%c2_94, %c2_95, %c0_96] : memref<4x18x18xf32, #tpu.memory_space<vmem>>, vector<1x16x16xf32>
    %436 = vector.shape_cast %435 : vector<1x16x16xf32> to vector<16x16xf32>
    %c24 = arith.constant 24 : index
    %437 = memref.load %arg2[%c24] : memref<144xf32, #tpu.memory_space<smem>>
    %438 = vector.broadcast %437 : f32 to vector<16x16xf32>
    %439 = arith.mulf %438, %436 : vector<16x16xf32>
    %440 = arith.addf %404, %439 : vector<16x16xf32>
    %c60 = arith.constant 60 : index
    %441 = memref.load %arg2[%c60] : memref<144xf32, #tpu.memory_space<smem>>
    %442 = vector.broadcast %441 : f32 to vector<16x16xf32>
    %443 = arith.mulf %442, %436 : vector<16x16xf32>
    %444 = arith.addf %408, %443 : vector<16x16xf32>
    %c96 = arith.constant 96 : index
    %445 = memref.load %arg2[%c96] : memref<144xf32, #tpu.memory_space<smem>>
    %446 = vector.broadcast %445 : f32 to vector<16x16xf32>
    %447 = arith.mulf %446, %436 : vector<16x16xf32>
    %448 = arith.addf %412, %447 : vector<16x16xf32>
    %c132 = arith.constant 132 : index
    %449 = memref.load %arg2[%c132] : memref<144xf32, #tpu.memory_space<smem>>
    %450 = vector.broadcast %449 : f32 to vector<16x16xf32>
    %451 = arith.mulf %450, %436 : vector<16x16xf32>
    %452 = arith.addf %416, %451 : vector<16x16xf32>
    %c2_97 = arith.constant 2 : index
    %c2_98 = arith.constant 2 : index
    %c1_99 = arith.constant 1 : index
    %453 = vector.load %arg5[%c2_97, %c2_98, %c1_99] : memref<4x18x18xf32, #tpu.memory_space<vmem>>, vector<1x16x16xf32>
    %454 = vector.shape_cast %453 : vector<1x16x16xf32> to vector<16x16xf32>
    %c25 = arith.constant 25 : index
    %455 = memref.load %arg2[%c25] : memref<144xf32, #tpu.memory_space<smem>>
    %456 = vector.broadcast %455 : f32 to vector<16x16xf32>
    %457 = arith.mulf %456, %454 : vector<16x16xf32>
    %458 = arith.addf %422, %457 : vector<16x16xf32>
    %c61 = arith.constant 61 : index
    %459 = memref.load %arg2[%c61] : memref<144xf32, #tpu.memory_space<smem>>
    %460 = vector.broadcast %459 : f32 to vector<16x16xf32>
    %461 = arith.mulf %460, %454 : vector<16x16xf32>
    %462 = arith.addf %426, %461 : vector<16x16xf32>
    %c97 = arith.constant 97 : index
    %463 = memref.load %arg2[%c97] : memref<144xf32, #tpu.memory_space<smem>>
    %464 = vector.broadcast %463 : f32 to vector<16x16xf32>
    %465 = arith.mulf %464, %454 : vector<16x16xf32>
    %466 = arith.addf %430, %465 : vector<16x16xf32>
    %c133 = arith.constant 133 : index
    %467 = memref.load %arg2[%c133] : memref<144xf32, #tpu.memory_space<smem>>
    %468 = vector.broadcast %467 : f32 to vector<16x16xf32>
    %469 = arith.mulf %468, %454 : vector<16x16xf32>
    %470 = arith.addf %434, %469 : vector<16x16xf32>
    %c2_100 = arith.constant 2 : index
    %c2_101 = arith.constant 2 : index
    %c2_102 = arith.constant 2 : index
    %471 = vector.load %arg5[%c2_100, %c2_101, %c2_102] : memref<4x18x18xf32, #tpu.memory_space<vmem>>, vector<1x16x16xf32>
    %472 = vector.shape_cast %471 : vector<1x16x16xf32> to vector<16x16xf32>
    %c26 = arith.constant 26 : index
    %473 = memref.load %arg2[%c26] : memref<144xf32, #tpu.memory_space<smem>>
    %474 = vector.broadcast %473 : f32 to vector<16x16xf32>
    %475 = arith.mulf %474, %472 : vector<16x16xf32>
    %476 = arith.addf %440, %475 : vector<16x16xf32>
    %c62 = arith.constant 62 : index
    %477 = memref.load %arg2[%c62] : memref<144xf32, #tpu.memory_space<smem>>
    %478 = vector.broadcast %477 : f32 to vector<16x16xf32>
    %479 = arith.mulf %478, %472 : vector<16x16xf32>
    %480 = arith.addf %444, %479 : vector<16x16xf32>
    %c98 = arith.constant 98 : index
    %481 = memref.load %arg2[%c98] : memref<144xf32, #tpu.memory_space<smem>>
    %482 = vector.broadcast %481 : f32 to vector<16x16xf32>
    %483 = arith.mulf %482, %472 : vector<16x16xf32>
    %484 = arith.addf %448, %483 : vector<16x16xf32>
    %c134 = arith.constant 134 : index
    %485 = memref.load %arg2[%c134] : memref<144xf32, #tpu.memory_space<smem>>
    %486 = vector.broadcast %485 : f32 to vector<16x16xf32>
    %487 = arith.mulf %486, %472 : vector<16x16xf32>
    %488 = arith.addf %452, %487 : vector<16x16xf32>
    %c3_103 = arith.constant 3 : index
    %c0_104 = arith.constant 0 : index
    %c0_105 = arith.constant 0 : index
    %489 = vector.load %arg5[%c3_103, %c0_104, %c0_105] : memref<4x18x18xf32, #tpu.memory_space<vmem>>, vector<1x16x16xf32>
    %490 = vector.shape_cast %489 : vector<1x16x16xf32> to vector<16x16xf32>
    %c27 = arith.constant 27 : index
    %491 = memref.load %arg2[%c27] : memref<144xf32, #tpu.memory_space<smem>>
    %492 = vector.broadcast %491 : f32 to vector<16x16xf32>
    %493 = arith.mulf %492, %490 : vector<16x16xf32>
    %494 = arith.addf %458, %493 : vector<16x16xf32>
    %c63 = arith.constant 63 : index
    %495 = memref.load %arg2[%c63] : memref<144xf32, #tpu.memory_space<smem>>
    %496 = vector.broadcast %495 : f32 to vector<16x16xf32>
    %497 = arith.mulf %496, %490 : vector<16x16xf32>
    %498 = arith.addf %462, %497 : vector<16x16xf32>
    %c99 = arith.constant 99 : index
    %499 = memref.load %arg2[%c99] : memref<144xf32, #tpu.memory_space<smem>>
    %500 = vector.broadcast %499 : f32 to vector<16x16xf32>
    %501 = arith.mulf %500, %490 : vector<16x16xf32>
    %502 = arith.addf %466, %501 : vector<16x16xf32>
    %c135 = arith.constant 135 : index
    %503 = memref.load %arg2[%c135] : memref<144xf32, #tpu.memory_space<smem>>
    %504 = vector.broadcast %503 : f32 to vector<16x16xf32>
    %505 = arith.mulf %504, %490 : vector<16x16xf32>
    %506 = arith.addf %470, %505 : vector<16x16xf32>
    %c3_106 = arith.constant 3 : index
    %c0_107 = arith.constant 0 : index
    %c1_108 = arith.constant 1 : index
    %507 = vector.load %arg5[%c3_106, %c0_107, %c1_108] : memref<4x18x18xf32, #tpu.memory_space<vmem>>, vector<1x16x16xf32>
    %508 = vector.shape_cast %507 : vector<1x16x16xf32> to vector<16x16xf32>
    %c28 = arith.constant 28 : index
    %509 = memref.load %arg2[%c28] : memref<144xf32, #tpu.memory_space<smem>>
    %510 = vector.broadcast %509 : f32 to vector<16x16xf32>
    %511 = arith.mulf %510, %508 : vector<16x16xf32>
    %512 = arith.addf %476, %511 : vector<16x16xf32>
    %c64 = arith.constant 64 : index
    %513 = memref.load %arg2[%c64] : memref<144xf32, #tpu.memory_space<smem>>
    %514 = vector.broadcast %513 : f32 to vector<16x16xf32>
    %515 = arith.mulf %514, %508 : vector<16x16xf32>
    %516 = arith.addf %480, %515 : vector<16x16xf32>
    %c100 = arith.constant 100 : index
    %517 = memref.load %arg2[%c100] : memref<144xf32, #tpu.memory_space<smem>>
    %518 = vector.broadcast %517 : f32 to vector<16x16xf32>
    %519 = arith.mulf %518, %508 : vector<16x16xf32>
    %520 = arith.addf %484, %519 : vector<16x16xf32>
    %c136 = arith.constant 136 : index
    %521 = memref.load %arg2[%c136] : memref<144xf32, #tpu.memory_space<smem>>
    %522 = vector.broadcast %521 : f32 to vector<16x16xf32>
    %523 = arith.mulf %522, %508 : vector<16x16xf32>
    %524 = arith.addf %488, %523 : vector<16x16xf32>
    %c3_109 = arith.constant 3 : index
    %c0_110 = arith.constant 0 : index
    %c2_111 = arith.constant 2 : index
    %525 = vector.load %arg5[%c3_109, %c0_110, %c2_111] : memref<4x18x18xf32, #tpu.memory_space<vmem>>, vector<1x16x16xf32>
    %526 = vector.shape_cast %525 : vector<1x16x16xf32> to vector<16x16xf32>
    %c29 = arith.constant 29 : index
    %527 = memref.load %arg2[%c29] : memref<144xf32, #tpu.memory_space<smem>>
    %528 = vector.broadcast %527 : f32 to vector<16x16xf32>
    %529 = arith.mulf %528, %526 : vector<16x16xf32>
    %530 = arith.addf %494, %529 : vector<16x16xf32>
    %c65 = arith.constant 65 : index
    %531 = memref.load %arg2[%c65] : memref<144xf32, #tpu.memory_space<smem>>
    %532 = vector.broadcast %531 : f32 to vector<16x16xf32>
    %533 = arith.mulf %532, %526 : vector<16x16xf32>
    %534 = arith.addf %498, %533 : vector<16x16xf32>
    %c101 = arith.constant 101 : index
    %535 = memref.load %arg2[%c101] : memref<144xf32, #tpu.memory_space<smem>>
    %536 = vector.broadcast %535 : f32 to vector<16x16xf32>
    %537 = arith.mulf %536, %526 : vector<16x16xf32>
    %538 = arith.addf %502, %537 : vector<16x16xf32>
    %c137 = arith.constant 137 : index
    %539 = memref.load %arg2[%c137] : memref<144xf32, #tpu.memory_space<smem>>
    %540 = vector.broadcast %539 : f32 to vector<16x16xf32>
    %541 = arith.mulf %540, %526 : vector<16x16xf32>
    %542 = arith.addf %506, %541 : vector<16x16xf32>
    %c3_112 = arith.constant 3 : index
    %c1_113 = arith.constant 1 : index
    %c0_114 = arith.constant 0 : index
    %543 = vector.load %arg5[%c3_112, %c1_113, %c0_114] : memref<4x18x18xf32, #tpu.memory_space<vmem>>, vector<1x16x16xf32>
    %544 = vector.shape_cast %543 : vector<1x16x16xf32> to vector<16x16xf32>
    %c30 = arith.constant 30 : index
    %545 = memref.load %arg2[%c30] : memref<144xf32, #tpu.memory_space<smem>>
    %546 = vector.broadcast %545 : f32 to vector<16x16xf32>
    %547 = arith.mulf %546, %544 : vector<16x16xf32>
    %548 = arith.addf %512, %547 : vector<16x16xf32>
    %c66 = arith.constant 66 : index
    %549 = memref.load %arg2[%c66] : memref<144xf32, #tpu.memory_space<smem>>
    %550 = vector.broadcast %549 : f32 to vector<16x16xf32>
    %551 = arith.mulf %550, %544 : vector<16x16xf32>
    %552 = arith.addf %516, %551 : vector<16x16xf32>
    %c102 = arith.constant 102 : index
    %553 = memref.load %arg2[%c102] : memref<144xf32, #tpu.memory_space<smem>>
    %554 = vector.broadcast %553 : f32 to vector<16x16xf32>
    %555 = arith.mulf %554, %544 : vector<16x16xf32>
    %556 = arith.addf %520, %555 : vector<16x16xf32>
    %c138 = arith.constant 138 : index
    %557 = memref.load %arg2[%c138] : memref<144xf32, #tpu.memory_space<smem>>
    %558 = vector.broadcast %557 : f32 to vector<16x16xf32>
    %559 = arith.mulf %558, %544 : vector<16x16xf32>
    %560 = arith.addf %524, %559 : vector<16x16xf32>
    %c3_115 = arith.constant 3 : index
    %c1_116 = arith.constant 1 : index
    %c1_117 = arith.constant 1 : index
    %561 = vector.load %arg5[%c3_115, %c1_116, %c1_117] : memref<4x18x18xf32, #tpu.memory_space<vmem>>, vector<1x16x16xf32>
    %562 = vector.shape_cast %561 : vector<1x16x16xf32> to vector<16x16xf32>
    %c31 = arith.constant 31 : index
    %563 = memref.load %arg2[%c31] : memref<144xf32, #tpu.memory_space<smem>>
    %564 = vector.broadcast %563 : f32 to vector<16x16xf32>
    %565 = arith.mulf %564, %562 : vector<16x16xf32>
    %566 = arith.addf %530, %565 : vector<16x16xf32>
    %c67 = arith.constant 67 : index
    %567 = memref.load %arg2[%c67] : memref<144xf32, #tpu.memory_space<smem>>
    %568 = vector.broadcast %567 : f32 to vector<16x16xf32>
    %569 = arith.mulf %568, %562 : vector<16x16xf32>
    %570 = arith.addf %534, %569 : vector<16x16xf32>
    %c103 = arith.constant 103 : index
    %571 = memref.load %arg2[%c103] : memref<144xf32, #tpu.memory_space<smem>>
    %572 = vector.broadcast %571 : f32 to vector<16x16xf32>
    %573 = arith.mulf %572, %562 : vector<16x16xf32>
    %574 = arith.addf %538, %573 : vector<16x16xf32>
    %c139 = arith.constant 139 : index
    %575 = memref.load %arg2[%c139] : memref<144xf32, #tpu.memory_space<smem>>
    %576 = vector.broadcast %575 : f32 to vector<16x16xf32>
    %577 = arith.mulf %576, %562 : vector<16x16xf32>
    %578 = arith.addf %542, %577 : vector<16x16xf32>
    %c3_118 = arith.constant 3 : index
    %c1_119 = arith.constant 1 : index
    %c2_120 = arith.constant 2 : index
    %579 = vector.load %arg5[%c3_118, %c1_119, %c2_120] : memref<4x18x18xf32, #tpu.memory_space<vmem>>, vector<1x16x16xf32>
    %580 = vector.shape_cast %579 : vector<1x16x16xf32> to vector<16x16xf32>
    %c32 = arith.constant 32 : index
    %581 = memref.load %arg2[%c32] : memref<144xf32, #tpu.memory_space<smem>>
    %582 = vector.broadcast %581 : f32 to vector<16x16xf32>
    %583 = arith.mulf %582, %580 : vector<16x16xf32>
    %584 = arith.addf %548, %583 : vector<16x16xf32>
    %c68 = arith.constant 68 : index
    %585 = memref.load %arg2[%c68] : memref<144xf32, #tpu.memory_space<smem>>
    %586 = vector.broadcast %585 : f32 to vector<16x16xf32>
    %587 = arith.mulf %586, %580 : vector<16x16xf32>
    %588 = arith.addf %552, %587 : vector<16x16xf32>
    %c104 = arith.constant 104 : index
    %589 = memref.load %arg2[%c104] : memref<144xf32, #tpu.memory_space<smem>>
    %590 = vector.broadcast %589 : f32 to vector<16x16xf32>
    %591 = arith.mulf %590, %580 : vector<16x16xf32>
    %592 = arith.addf %556, %591 : vector<16x16xf32>
    %c140 = arith.constant 140 : index
    %593 = memref.load %arg2[%c140] : memref<144xf32, #tpu.memory_space<smem>>
    %594 = vector.broadcast %593 : f32 to vector<16x16xf32>
    %595 = arith.mulf %594, %580 : vector<16x16xf32>
    %596 = arith.addf %560, %595 : vector<16x16xf32>
    %c3_121 = arith.constant 3 : index
    %c2_122 = arith.constant 2 : index
    %c0_123 = arith.constant 0 : index
    %597 = vector.load %arg5[%c3_121, %c2_122, %c0_123] : memref<4x18x18xf32, #tpu.memory_space<vmem>>, vector<1x16x16xf32>
    %598 = vector.shape_cast %597 : vector<1x16x16xf32> to vector<16x16xf32>
    %c33 = arith.constant 33 : index
    %599 = memref.load %arg2[%c33] : memref<144xf32, #tpu.memory_space<smem>>
    %600 = vector.broadcast %599 : f32 to vector<16x16xf32>
    %601 = arith.mulf %600, %598 : vector<16x16xf32>
    %602 = arith.addf %566, %601 : vector<16x16xf32>
    %c69 = arith.constant 69 : index
    %603 = memref.load %arg2[%c69] : memref<144xf32, #tpu.memory_space<smem>>
    %604 = vector.broadcast %603 : f32 to vector<16x16xf32>
    %605 = arith.mulf %604, %598 : vector<16x16xf32>
    %606 = arith.addf %570, %605 : vector<16x16xf32>
    %c105 = arith.constant 105 : index
    %607 = memref.load %arg2[%c105] : memref<144xf32, #tpu.memory_space<smem>>
    %608 = vector.broadcast %607 : f32 to vector<16x16xf32>
    %609 = arith.mulf %608, %598 : vector<16x16xf32>
    %610 = arith.addf %574, %609 : vector<16x16xf32>
    %c141 = arith.constant 141 : index
    %611 = memref.load %arg2[%c141] : memref<144xf32, #tpu.memory_space<smem>>
    %612 = vector.broadcast %611 : f32 to vector<16x16xf32>
    %613 = arith.mulf %612, %598 : vector<16x16xf32>
    %614 = arith.addf %578, %613 : vector<16x16xf32>
    %c3_124 = arith.constant 3 : index
    %c2_125 = arith.constant 2 : index
    %c1_126 = arith.constant 1 : index
    %615 = vector.load %arg5[%c3_124, %c2_125, %c1_126] : memref<4x18x18xf32, #tpu.memory_space<vmem>>, vector<1x16x16xf32>
    %616 = vector.shape_cast %615 : vector<1x16x16xf32> to vector<16x16xf32>
    %c34 = arith.constant 34 : index
    %617 = memref.load %arg2[%c34] : memref<144xf32, #tpu.memory_space<smem>>
    %618 = vector.broadcast %617 : f32 to vector<16x16xf32>
    %619 = arith.mulf %618, %616 : vector<16x16xf32>
    %620 = arith.addf %584, %619 : vector<16x16xf32>
    %c70 = arith.constant 70 : index
    %621 = memref.load %arg2[%c70] : memref<144xf32, #tpu.memory_space<smem>>
    %622 = vector.broadcast %621 : f32 to vector<16x16xf32>
    %623 = arith.mulf %622, %616 : vector<16x16xf32>
    %624 = arith.addf %588, %623 : vector<16x16xf32>
    %c106 = arith.constant 106 : index
    %625 = memref.load %arg2[%c106] : memref<144xf32, #tpu.memory_space<smem>>
    %626 = vector.broadcast %625 : f32 to vector<16x16xf32>
    %627 = arith.mulf %626, %616 : vector<16x16xf32>
    %628 = arith.addf %592, %627 : vector<16x16xf32>
    %c142 = arith.constant 142 : index
    %629 = memref.load %arg2[%c142] : memref<144xf32, #tpu.memory_space<smem>>
    %630 = vector.broadcast %629 : f32 to vector<16x16xf32>
    %631 = arith.mulf %630, %616 : vector<16x16xf32>
    %632 = arith.addf %596, %631 : vector<16x16xf32>
    %c3_127 = arith.constant 3 : index
    %c2_128 = arith.constant 2 : index
    %c2_129 = arith.constant 2 : index
    %633 = vector.load %arg5[%c3_127, %c2_128, %c2_129] : memref<4x18x18xf32, #tpu.memory_space<vmem>>, vector<1x16x16xf32>
    %634 = vector.shape_cast %633 : vector<1x16x16xf32> to vector<16x16xf32>
    %c35 = arith.constant 35 : index
    %635 = memref.load %arg2[%c35] : memref<144xf32, #tpu.memory_space<smem>>
    %636 = vector.broadcast %635 : f32 to vector<16x16xf32>
    %637 = arith.mulf %636, %634 : vector<16x16xf32>
    %638 = arith.addf %602, %637 : vector<16x16xf32>
    %c71 = arith.constant 71 : index
    %639 = memref.load %arg2[%c71] : memref<144xf32, #tpu.memory_space<smem>>
    %640 = vector.broadcast %639 : f32 to vector<16x16xf32>
    %641 = arith.mulf %640, %634 : vector<16x16xf32>
    %642 = arith.addf %606, %641 : vector<16x16xf32>
    %c107 = arith.constant 107 : index
    %643 = memref.load %arg2[%c107] : memref<144xf32, #tpu.memory_space<smem>>
    %644 = vector.broadcast %643 : f32 to vector<16x16xf32>
    %645 = arith.mulf %644, %634 : vector<16x16xf32>
    %646 = arith.addf %610, %645 : vector<16x16xf32>
    %c143 = arith.constant 143 : index
    %647 = memref.load %arg2[%c143] : memref<144xf32, #tpu.memory_space<smem>>
    %648 = vector.broadcast %647 : f32 to vector<16x16xf32>
    %649 = arith.mulf %648, %634 : vector<16x16xf32>
    %650 = arith.addf %614, %649 : vector<16x16xf32>
    %651 = arith.addf %620, %638 : vector<16x16xf32>
    %652 = arith.addf %624, %642 : vector<16x16xf32>
    %653 = arith.addf %628, %646 : vector<16x16xf32>
    %654 = arith.addf %632, %650 : vector<16x16xf32>
    %c0_130 = arith.constant 0 : index
    %655 = memref.load %arg3[%c0_130] : memref<4xf32, #tpu.memory_space<smem>>
    %656 = vector.broadcast %655 : f32 to vector<16x16xf32>
    %657 = arith.addf %651, %656 : vector<16x16xf32>
    %cst_131 = arith.constant 0.000000e+00 : f32
    %658 = vector.broadcast %cst_131 : f32 to vector<16x16xf32>
    %659 = arith.maximumf %657, %658 : vector<16x16xf32>
    %c0_132 = arith.constant 0 : index
    %c0_133 = arith.constant 0 : index
    %c0_134 = arith.constant 0 : index
    %c0_135 = arith.constant 0 : index
    %660 = vector.load %arg4[%c0_132, %c0_133, %c0_134, %c0_135] : memref<1x4x16x16xf32, #tpu.memory_space<vmem>>, vector<1x1x16x16xf32>
    %661 = vector.shape_cast %660 : vector<1x1x16x16xf32> to vector<16x16xf32>
    %662 = vector.shape_cast %659 : vector<16x16xf32> to vector<1x1x16x16xf32>
    tpu.vector_store %arg4[%c0_132, %c0_133, %c0_134, %c0_135], %662 {strides = array<i32>} : memref<1x4x16x16xf32, #tpu.memory_space<vmem>>, vector<1x1x16x16xf32>,
    %c1_136 = arith.constant 1 : index
    %663 = memref.load %arg3[%c1_136] : memref<4xf32, #tpu.memory_space<smem>>
    %664 = vector.broadcast %663 : f32 to vector<16x16xf32>
    %665 = arith.addf %652, %664 : vector<16x16xf32>
    %cst_137 = arith.constant 0.000000e+00 : f32
    %666 = vector.broadcast %cst_137 : f32 to vector<16x16xf32>
    %667 = arith.maximumf %665, %666 : vector<16x16xf32>
    %c0_138 = arith.constant 0 : index
    %c1_139 = arith.constant 1 : index
    %c0_140 = arith.constant 0 : index
    %c0_141 = arith.constant 0 : index
    %668 = vector.load %arg4[%c0_138, %c1_139, %c0_140, %c0_141] : memref<1x4x16x16xf32, #tpu.memory_space<vmem>>, vector<1x1x16x16xf32>
    %669 = vector.shape_cast %668 : vector<1x1x16x16xf32> to vector<16x16xf32>
    %670 = vector.shape_cast %667 : vector<16x16xf32> to vector<1x1x16x16xf32>
    tpu.vector_store %arg4[%c0_138, %c1_139, %c0_140, %c0_141], %670 {strides = array<i32>} : memref<1x4x16x16xf32, #tpu.memory_space<vmem>>, vector<1x1x16x16xf32>,
    %c2_142 = arith.constant 2 : index
    %671 = memref.load %arg3[%c2_142] : memref<4xf32, #tpu.memory_space<smem>>
    %672 = vector.broadcast %671 : f32 to vector<16x16xf32>
    %673 = arith.addf %653, %672 : vector<16x16xf32>
    %cst_143 = arith.constant 0.000000e+00 : f32
    %674 = vector.broadcast %cst_143 : f32 to vector<16x16xf32>
    %675 = arith.maximumf %673, %674 : vector<16x16xf32>
    %c0_144 = arith.constant 0 : index
    %c2_145 = arith.constant 2 : index
    %c0_146 = arith.constant 0 : index
    %c0_147 = arith.constant 0 : index
    %676 = vector.load %arg4[%c0_144, %c2_145, %c0_146, %c0_147] : memref<1x4x16x16xf32, #tpu.memory_space<vmem>>, vector<1x1x16x16xf32>
    %677 = vector.shape_cast %676 : vector<1x1x16x16xf32> to vector<16x16xf32>
    %678 = vector.shape_cast %675 : vector<16x16xf32> to vector<1x1x16x16xf32>
    tpu.vector_store %arg4[%c0_144, %c2_145, %c0_146, %c0_147], %678 {strides = array<i32>} : memref<1x4x16x16xf32, #tpu.memory_space<vmem>>, vector<1x1x16x16xf32>,
    %c3_148 = arith.constant 3 : index
    %679 = memref.load %arg3[%c3_148] : memref<4xf32, #tpu.memory_space<smem>>
    %680 = vector.broadcast %679 : f32 to vector<16x16xf32>
    %681 = arith.addf %654, %680 : vector<16x16xf32>
    %cst_149 = arith.constant 0.000000e+00 : f32
    %682 = vector.broadcast %cst_149 : f32 to vector<16x16xf32>
    %683 = arith.maximumf %681, %682 : vector<16x16xf32>
    %c0_150 = arith.constant 0 : index
    %c3_151 = arith.constant 3 : index
    %c0_152 = arith.constant 0 : index
    %c0_153 = arith.constant 0 : index
    %684 = vector.load %arg4[%c0_150, %c3_151, %c0_152, %c0_153] : memref<1x4x16x16xf32, #tpu.memory_space<vmem>>, vector<1x1x16x16xf32>
    %685 = vector.shape_cast %684 : vector<1x1x16x16xf32> to vector<16x16xf32>
    %686 = vector.shape_cast %683 : vector<16x16xf32> to vector<1x1x16x16xf32>
    tpu.vector_store %arg4[%c0_150, %c3_151, %c0_152, %c0_153], %686 {strides = array<i32>} : memref<1x4x16x16xf32, #tpu.memory_space<vmem>>, vector<1x1x16x16xf32>,
    return
  }
  func.func @transform_0(%arg0: i32) -> (i32, i32, i32, i32) {
    %c0_i32 = arith.constant 0 : i32
    %c0_i32_0 = arith.constant 0 : i32
    %c0_i32_1 = arith.constant 0 : i32
    %c0_i32_2 = arith.constant 0 : i32
    return %arg0, %c0_i32, %c0_i32_0, %c0_i32_1 : i32, i32, i32, i32
  }
  func.func @transform_1(%arg0: i32) -> i32 {
    %c0_i32 = arith.constant 0 : i32
    %c0_i32_0 = arith.constant 0 : i32
    return %c0_i32 : i32
  }
  func.func @transform_2(%arg0: i32) -> i32 {
    %c0_i32 = arith.constant 0 : i32
    %c0_i32_0 = arith.constant 0 : i32
    return %c0_i32 : i32
  }
  func.func @transform_3(%arg0: i32) -> (i32, i32, i32, i32) {
    %c0_i32 = arith.constant 0 : i32
    %c0_i32_0 = arith.constant 0 : i32
    %c0_i32_1 = arith.constant 0 : i32
    %c0_i32_2 = arith.constant 0 : i32
    return %arg0, %c0_i32, %c0_i32_0, %c0_i32_1 : i32, i32, i32, i32
  }
}

</mosaic_0001>

<llo_original>
// kernel: tpu_custom_call.1
$region0: #{tpu_custom_call.1}
  #allocation0 [shape = 'u32[]', space=smem, size = 0x4, offset = 0x4, fixed_abs, tag = 'smem constant byte address 0x4 - core index']
  #allocation1 [shape = 'u32[72,128]{1,0:T(1,128)}', space=vmem, size = 0x9000, scoped, tag = 'internal scratch']
  #allocation2 [shape = 'f32[4,18,18]{2,1,0:T(8,128)}', space=vmem, size = 0xc000, scoped, tag = 'scratch operand']
  %s0 = inlined_call_operand.hbm [shape: f32[2,4,16,16], index: 0, kind: input, shape index: {}]
  %s1 = inlined_call_operand.hbm [shape: f32[144], index: 1, kind: input, shape index: {}]
  %s2 = inlined_call_operand.vmem [shape: f32[4], index: 2, kind: input, shape index: {}]
  %s3 = inlined_call_operand.hbm [shape: f32[2,4,16,16], index: 3, kind: output, shape index: {}]
  %s4 = sld [smem:[#allocation0]]
  $region57: #{tpu_custom_call.1} parent=0
    _
  %s6 = ssub.s32 1, %s4
  %s7 = scalar_select 0, %s6, %s4
  $region1: #{tpu_custom_call.1} parent=0
    #allocation3 [shape = 'u8[65536]{0}', space=vmem, size = 0x10000, scoped, tag = 'input window, operand 0']
    #allocation4 [shape = 's32[2]{0}', space=sflag, size = 0x8, scoped, tag = 'scoped memory for tpu_custom_call.1']
    #allocation5 [shape = 's32[2]{0}', space=sflag, size = 0x8, scoped, tag = 'scoped memory for tpu_custom_call.1']
    #allocation6 [shape = 's32[2]{0}', space=sflag, size = 0x8, scoped, tag = 'scoped memory for tpu_custom_call.1']
    #allocation7 [shape = 's32[2]{0}', space=sflag, size = 0x8, scoped, tag = 'scoped memory for tpu_custom_call.1']
    #allocation8 [shape = 'u8[1024]{0}', space=smem, size = 0x400, scoped, tag = 'input window, operand 1, single buffered']
    #allocation9 [shape = 'u8[512]{0}', space=smem, size = 0x200, scoped, tag = 'input window, operand 2, single buffered']
    #allocation10 [shape = 'u8[65536]{0}', space=vmem, size = 0x10000, scoped, tag = 'output window, operand 0']
    %8 = vsyncpa [#allocation4], 0
    %s9 = scalar_lea.sflag [#allocation4], 1
    %10 = vsyncpa %s9, 0
    %11 = vsyncpa [#allocation6], 0
    %12 = vsyncpa [#allocation7], 0
    %13 = vsyncpa [#allocation5], 0
    %s14 = scalar_lea.sflag [#allocation5], 1
    %15 = vsyncpa %s14, 0
    loop: start=0, step=1, limit=4
    $region2: #{tpu_custom_call.1} parent=1 // loop_pre_header
      _
    $region3: #{tpu_custom_call.1} parent=1 // loop_header
      %s17 = sphi 0, %s21
      %p18 = scmp.ge.s32.totalorder %s17, 4
      %s27 = sphi 0, %s29
      %s30 = sphi 0, %s27
      %s31 = sphi 0, %s30
      %s47 = sphi 0, %s31
      %s51 = sphi 0, %s51
      %s53 = sphi 0, %s51
      %s54 = sphi 0, %s53
      %s68 = sphi 0, %s54
      %s72 = sphi 0, %s72
      %s74 = sphi 0, %s72
      %s75 = sphi 0, %s74
      %s89 = sphi 0, %s75
      %s95 = sphi 0, %s97
      %s98 = sphi 0, %s95
      %s99 = sphi 0, %s98
      %s115 = sphi 0, %s99
    $region4: #{tpu_custom_call.1} parent=1 // loop_header_branch
      %20 = sbr.rel (%p18) target = $region8
    $region5: #{tpu_custom_call.1} parent=1 // loop_body
      %s22 = ssub.s32 %s17, 1
      %s23 = ssub.s32 %s17, 2
      %s24 = sadd.s32 %s17, 1
      %s25 = ssub.s32 %s17, %s24
      %p26 = scmp.eq.s32.totalorder %s25, 0
      %s28 = sadd.s32 %s27, 1
      %s29 = scalar_select %p26, %s27, %s28
      %p32 = pneg %p26
      %p33 = scmp.eq.s32.totalorder %s17, 1
      %p34 = por %p32, %p33
      %p35 = scmp.ne.s32.totalorder %s27, %s30
      %p36 = scmp.eq.s32.totalorder %s17, 0
      %p37 = por %p35, %p36
      %p38 = scmp.ne.s32.totalorder %s27, %s30
      %p39 = scmp.eq.s32.totalorder %s22, 1
      %p40 = por %p38, %p39
      %p41 = scmp.ne.s32.totalorder %s30, %s31
      %p42 = scmp.eq.s32.totalorder %s22, 0
      %p43 = por %p41, %p42
      %p44 = scmp.ne.s32.totalorder %s30, %s31
      %p45 = scmp.eq.s32.totalorder %s23, 1
      %p46 = por %p44, %p45
      %p48 = scmp.ne.s32.totalorder %s31, %s47
      %p49 = scmp.eq.s32.totalorder %s23, 0
      %p50 = por %p48, %p49
      %s52 = sadd.s32 %s51, 1
      %p55 = scmp.eq.s32.totalorder %s17, 1
      %p56 = scmp.ne.s32.totalorder %s51, %s53
      %p57 = scmp.eq.s32.totalorder %s17, 0
      %p58 = por %p56, %p57
      %p59 = scmp.ne.s32.totalorder %s51, %s53
      %p60 = scmp.eq.s32.totalorder %s22, 1
      %p61 = por %p59, %p60
      %p62 = scmp.ne.s32.totalorder %s53, %s54
      %p63 = scmp.eq.s32.totalorder %s22, 0
      %p64 = por %p62, %p63
      %p65 = scmp.ne.s32.totalorder %s53, %s54
      %p66 = scmp.eq.s32.totalorder %s23, 1
      %p67 = por %p65, %p66
      %p69 = scmp.ne.s32.totalorder %s54, %s68
      %p70 = scmp.eq.s32.totalorder %s23, 0
      %p71 = por %p69, %p70
      %s73 = sadd.s32 %s72, 1
      %p76 = scmp.eq.s32.totalorder %s17, 1
      %p77 = scmp.ne.s32.totalorder %s72, %s74
      %p78 = scmp.eq.s32.totalorder %s17, 0
      %p79 = por %p77, %p78
      %p80 = scmp.ne.s32.totalorder %s72, %s74
      %p81 = scmp.eq.s32.totalorder %s22, 1
      %p82 = por %p80, %p81
      %p83 = scmp.ne.s32.totalorder %s74, %s75
      %p84 = scmp.eq.s32.totalorder %s22, 0
      %p85 = por %p83, %p84
      %p86 = scmp.ne.s32.totalorder %s74, %s75
      %p87 = scmp.eq.s32.totalorder %s23, 1
      %p88 = por %p86, %p87
      %p90 = scmp.ne.s32.totalorder %s75, %s89
      %p91 = scmp.eq.s32.totalorder %s23, 0
      %p92 = por %p90, %p91
      %s93 = ssub.s32 %s17, %s24
      %p94 = scmp.eq.s32.totalorder %s93, 0
      %s96 = sadd.s32 %s95, 1
      %s97 = scalar_select %p94, %s95, %s96
      %p100 = pneg %p94
      %p101 = scmp.eq.s32.totalorder %s17, 1
      %p102 = por %p100, %p101
      %p103 = scmp.ne.s32.totalorder %s95, %s98
      %p104 = scmp.eq.s32.totalorder %s17, 0
      %p105 = por %p103, %p104
      %p106 = scmp.ne.s32.totalorder %s95, %s98
      %p107 = scmp.eq.s32.totalorder %s22, 1
      %p108 = por %p106, %p107
      %p109 = scmp.ne.s32.totalorder %s98, %s99
      %p110 = scmp.eq.s32.totalorder %s22, 0
      %p111 = por %p109, %p110
      %p112 = scmp.ne.s32.totalorder %s98, %s99
      %p113 = scmp.eq.s32.totalorder %s23, 1
      %p114 = por %p112, %p113
      %p116 = scmp.ne.s32.totalorder %s99, %s115
      %p117 = scmp.eq.s32.totalorder %s23, 0
      %p118 = por %p116, %p117
      %p119 = scmp.le.s32.totalorder 1, %s17
      %p120 = scmp.lt.s32.totalorder %s17, 3
      %p121 = pnand %p119, %p120
      %p122 = pneg %p121
      // Predicated region
      $region9: #{tpu_custom_call.1} parent=5 // pred_check
        _
      $region10: #{tpu_custom_call.1} parent=5 // pred_check_branch
        %124 = sbr.rel (%p121) target = $region12
      $region11: #{tpu_custom_call.1} parent=5 // pred_region
        %s125 = ssub.s32 %s17, 1
        // Predicated region
        $region13: #{tpu_custom_call.1} parent=11 // pred_check
          %p126 = pneg %p64
        $region14: #{tpu_custom_call.1} parent=11 // pred_check_branch
          %128 = sbr.rel (%p126) target = $region16
        $region15: #{tpu_custom_call.1} parent=11 // pred_region
          %130 = vsyncadd [#allocation6], 0
          %s132 = sshll.u32 %s1, 4
          %s133 = int_to_ptr.hbm [resolvable:$true] %s132
          %135 = dma.hbm_to_smem %s133, 32, [#allocation8], [#allocation6]
        $region16: #{tpu_custom_call.1} parent=11 // pred_fallthru
          _
        // Predicated region
        $region17: #{tpu_custom_call.1} parent=11 // pred_check
          %p136 = pneg %p85
        $region18: #{tpu_custom_call.1} parent=11 // pred_check_branch
          %138 = sbr.rel (%p136) target = $region20
        $region19: #{tpu_custom_call.1} parent=11 // pred_region
          %140 = vsyncadd [#allocation7], 0
          %s142 = sshll.u32 %s2, 4
          %s143 = int_to_ptr.vmem [resolvable:$true] %s142
          %145 = dma.vmem_to_smem %s143, 16, [#allocation9], [#allocation7]
        $region20: #{tpu_custom_call.1} parent=11 // pred_fallthru
          _
      $region12: #{tpu_custom_call.1} parent=5 // pred_fallthru
        _
      %p146 = scmp.lt.s32.totalorder %s17, 2
      // Predicated region
      $region21: #{tpu_custom_call.1} parent=5 // pred_check
        %p147 = pneg %p146
      $region22: #{tpu_custom_call.1} parent=5 // pred_check_branch
        %149 = sbr.rel (%p147) target = $region24
      $region23: #{tpu_custom_call.1} parent=5 // pred_region
        // Predicated region
        $region25: #{tpu_custom_call.1} parent=23 // pred_check
          %p150 = pneg %p37
        $region26: #{tpu_custom_call.1} parent=23 // pred_check_branch
          %152 = sbr.rel (%p150) target = $region28
        $region27: #{tpu_custom_call.1} parent=23 // pred_region
          %s153 = sand.u32 %s27, 1
          %s154 = scalar_lea.sflag [#allocation4], %s153
          %s155 = sand.u32 %s27, 1
          %s156 = smul.addr %s155, 64
          %s157 = scalar_lea.vmem [#allocation3], %s156
          %159 = vsyncadd %s154, 0
          %s160 = smul.addr %s17, 8
          %s161 = smul.addr %s160, 8
          %s162 = scalar_lea.hbm %s0, %s161
          %s163 = sshll.u32 %s162, 4
          %s164 = int_to_ptr.hbm [resolvable:$true] %s163
          %s165 = sshll.u32 %s157, 4
          %s166 = int_to_ptr.vmem [resolvable:$true] %s165
          %171 = dma.hbm_to_vmem [thread:$0]  %s164, 1024, %s166, %s154, 128, 128, 8
        $region28: #{tpu_custom_call.1} parent=23 // pred_fallthru
          _
      $region24: #{tpu_custom_call.1} parent=5 // pred_fallthru
        _
      %p172 = scmp.le.s32.totalorder 1, %s17
      %p173 = scmp.lt.s32.totalorder %s17, 3
      %p174 = pnand %p172, %p173
      %p175 = pneg %p174
      // Predicated region
      $region29: #{tpu_custom_call.1} parent=5 // pred_check
        _
      $region30: #{tpu_custom_call.1} parent=5 // pred_check_branch
        %177 = sbr.rel (%p174) target = $region32
      $region31: #{tpu_custom_call.1} parent=5 // pred_region
        %s178 = ssub.s32 %s17, 1
        %s179 = sand.u32 %s30, 1
        %s180 = scalar_lea.sflag [#allocation4], %s179
        %s181 = sand.u32 %s30, 1
        %s182 = smul.addr %s181, 64
        %s183 = scalar_lea.vmem [#allocation3], %s182
        // Predicated region
        $region33: #{tpu_custom_call.1} parent=31 // pred_check
          %p184 = pneg %p43
        $region34: #{tpu_custom_call.1} parent=31 // pred_check_branch
          %186 = sbr.rel (%p184) target = $region36
        $region35: #{tpu_custom_call.1} parent=31 // pred_region
          %188 = dma.done %s180, 1024
        $region36: #{tpu_custom_call.1} parent=31 // pred_fallthru
          _
        // Predicated region
        $region37: #{tpu_custom_call.1} parent=31 // pred_check
          %p189 = pneg %p64
        $region38: #{tpu_custom_call.1} parent=31 // pred_check_branch
          %191 = sbr.rel (%p189) target = $region40
        $region39: #{tpu_custom_call.1} parent=31 // pred_region
          %193 = dma.done [#allocation6], 32
        $region40: #{tpu_custom_call.1} parent=31 // pred_fallthru
          _
        // Predicated region
        $region41: #{tpu_custom_call.1} parent=31 // pred_check
          %p194 = pneg %p85
        $region42: #{tpu_custom_call.1} parent=31 // pred_check_branch
          %196 = sbr.rel (%p194) target = $region44
        $region43: #{tpu_custom_call.1} parent=31 // pred_region
          %198 = dma.done [#allocation7], 16
        $region44: #{tpu_custom_call.1} parent=31 // pred_fallthru
          _
        %199 = sfence
        %s200 = sand.u32 %s30, 1
        %s201 = scalar_lea.sflag [#allocation4], %s200
        %s202 = sand.u32 %s30, 1
        %s203 = smul.addr %s202, 64
        %s204 = scalar_lea.vmem [#allocation3], %s203
        %p205 = pneg %p43
        %p206 = pneg %p40
        %p207 = pneg %p64
        %p208 = pneg %p61
        %p209 = pneg %p85
        %p210 = pneg %p82
        %p211 = pneg %p111
        %p212 = pneg %p108
        %s213 = sand.u32 %s98, 1
        %s214 = scalar_lea.sflag [#allocation5], %s213
        %s215 = sand.u32 %s98, 1
        %s216 = smul.addr %s215, 64
        %s217 = scalar_lea.vmem [#allocation10], %s216
        %vm218 = vcmask 139264
        %219 = vst.msk [vmem:[#allocation2] sm:$0x1] %vm218, 0.0
        %220 = vst.msk [vmem:[#allocation2 + $0x18] sm:$0x1] %vm218, 0.0
        %221 = vst.msk [vmem:[#allocation2 + $0x30] sm:$0x1] %vm218, 0.0
        %222 = vst.msk [vmem:[#allocation2 + $0x48] sm:$0x1] %vm218, 0.0
        %223 = vst.msk [vmem:[#allocation2 + $0x11] sm:$0x1] %vm218, 0.0
        %224 = vst.msk [vmem:[#allocation2 + $0x29] sm:$0x1] %vm218, 0.0
        %225 = vst.msk [vmem:[#allocation2 + $0x41] sm:$0x1] %vm218, 0.0
        %226 = vst.msk [vmem:[#allocation2 + $0x59] sm:$0x1] %vm218, 0.0
        %vm227 = vcmask 7168
        %228 = vst.msk [vmem:[#allocation2 + $0x1] sm:$0xff] %vm227, 0.0
        %229 = vst.msk [vmem:[#allocation2 + $0x9] sm:$0xff] %vm227, 0.0
        %230 = vst.msk [vmem:[#allocation2 + $0x19] sm:$0xff] %vm227, 0.0
        %231 = vst.msk [vmem:[#allocation2 + $0x21] sm:$0xff] %vm227, 0.0
        %232 = vst.msk [vmem:[#allocation2 + $0x31] sm:$0xff] %vm227, 0.0
        %233 = vst.msk [vmem:[#allocation2 + $0x39] sm:$0xff] %vm227, 0.0
        %234 = vst.msk [vmem:[#allocation2 + $0x49] sm:$0xff] %vm227, 0.0
        %235 = vst.msk [vmem:[#allocation2 + $0x51] sm:$0xff] %vm227, 0.0
        %vm236 = vcmask 146568
        %237 = vst.msk [vmem:[#allocation2 + $0x1] sm:$0xff] %vm236, 0.0
        %238 = vst.msk [vmem:[#allocation2 + $0x9] sm:$0xff] %vm236, 0.0
        %239 = vst.msk [vmem:[#allocation2 + $0x19] sm:$0xff] %vm236, 0.0
        %240 = vst.msk [vmem:[#allocation2 + $0x21] sm:$0xff] %vm236, 0.0
        %241 = vst.msk [vmem:[#allocation2 + $0x31] sm:$0xff] %vm236, 0.0
        %242 = vst.msk [vmem:[#allocation2 + $0x39] sm:$0xff] %vm236, 0.0
        %243 = vst.msk [vmem:[#allocation2 + $0x49] sm:$0xff] %vm236, 0.0
        %244 = vst.msk [vmem:[#allocation2 + $0x51] sm:$0xff] %vm236, 0.0
        %v245 = vld [vmem:[%s183] sm:$0xff]
        %v246 = vld [vmem:[%s183 + $0x8] sm:$0xff]
        %v247 = vld [vmem:[%s183 + $0x10] sm:$0xff]
        %v248 = vld [vmem:[%s183 + $0x18] sm:$0xff]
        %v249 = vld [vmem:[%s183 + $0x20] sm:$0xff]
        %v250 = vld [vmem:[%s183 + $0x28] sm:$0xff]
        %v251 = vld [vmem:[%s183 + $0x30] sm:$0xff]
        %v252 = vld [vmem:[%s183 + $0x38] sm:$0xff]
        %261 = vrot.lane.b32.xlu0 %v245, 1
        %v262 = vpop.permute.xlu0 %261
        %263 = vrot.lane.b32.xlu0 %v246, 1
        %v264 = vpop.permute.xlu0 %263
        %265 = vrot.lane.b32.xlu0 %v247, 1
        %v266 = vpop.permute.xlu0 %265
        %267 = vrot.lane.b32.xlu0 %v248, 1
        %v268 = vpop.permute.xlu0 %267
        %269 = vrot.lane.b32.xlu0 %v249, 1
        %v270 = vpop.permute.xlu0 %269
        %271 = vrot.lane.b32.xlu0 %v250, 1
        %v272 = vpop.permute.xlu0 %271
        %273 = vrot.lane.b32.xlu0 %v251, 1
        %v274 = vpop.permute.xlu0 %273
        %275 = vrot.lane.b32.xlu0 %v252, 1
        %v276 = vpop.permute.xlu0 %275
        %vm285 = vcmask 138248
        %286 = vst.msk [vmem:[#allocation2 + $0x1] sm:$0xff] %vm285, %v262
        %287 = vst.msk [vmem:[#allocation2 + $0x9] sm:$0xff] %vm285, %v264
        %288 = vst.msk [vmem:[#allocation2 + $0x19] sm:$0xff] %vm285, %v266
        %289 = vst.msk [vmem:[#allocation2 + $0x21] sm:$0xff] %vm285, %v268
        %290 = vst.msk [vmem:[#allocation2 + $0x31] sm:$0xff] %vm285, %v270
        %291 = vst.msk [vmem:[#allocation2 + $0x39] sm:$0xff] %vm285, %v272
        %292 = vst.msk [vmem:[#allocation2 + $0x49] sm:$0xff] %vm285, %v274
        %293 = vst.msk [vmem:[#allocation2 + $0x51] sm:$0xff] %vm285, %v276
        %v294 = vld [vmem:[#allocation2] sm:$0xff]
        %v295 = vld [vmem:[#allocation2 + $0x8] sm:$0xff]
        %s296 = sld [smem:[#allocation8]]
        %v297 = vstv %s296
        %v298 = vmul.f32 %v297, %v294
        %v299 = vmul.f32 %v297, %v295
        %s300 = sld [smem:[#allocation8 + $0x24]]
        %v301 = vstv %s300
        %v302 = vmul.f32 %v301, %v294
        %v303 = vmul.f32 %v301, %v295
        %s304 = sld [smem:[#allocation8 + $0x48]]
        %v305 = vstv %s304
        %v306 = vmul.f32 %v305, %v294
        %v307 = vmul.f32 %v305, %v295
        %s308 = sld [smem:[#allocation8 + $0x6c]]
        %v309 = vstv %s308
        %v310 = vmul.f32 %v309, %v294
        %v311 = vmul.f32 %v309, %v295
        %s312 = sld [smem:[#allocation8 + $0x1]]
        %v313 = vstv %s312
        %v314 = vmul.f32 %v313, %v294
        %v315 = vmul.f32 %v313, %v295
        %s316 = sld [smem:[#allocation8 + $0x25]]
        %v317 = vstv %s316
        %v318 = vmul.f32 %v317, %v294
        %v319 = vmul.f32 %v317, %v295
        %s320 = sld [smem:[#allocation8 + $0x49]]
        %v321 = vstv %s320
        %v322 = vmul.f32 %v321, %v294
        %v323 = vmul.f32 %v321, %v295
        %s324 = sld [smem:[#allocation8 + $0x6d]]
        %v325 = vstv %s324
        %v326 = vmul.f32 %v325, %v294
        %v327 = vmul.f32 %v325, %v295
        %s328 = sld [smem:[#allocation8 + $0x2]]
        %v329 = vstv %s328
        %v330 = vmul.f32 %v329, %v294
        %v331 = vmul.f32 %v329, %v295
        %334 = vrot.lane.b32.xlu0 %v330, 126
        %v335 = vpop.permute.xlu0 %334
        %336 = vrot.lane.b32.xlu0 %v331, 126
        %v337 = vpop.permute.xlu0 %336
        %v340 = vadd.f32 %v298, %v335
        %v341 = vadd.f32 %v299, %v337
        %s342 = sld [smem:[#allocation8 + $0x26]]
        %v343 = vstv %s342
        %v344 = vmul.f32 %v343, %v294
        %v345 = vmul.f32 %v343, %v295
        %348 = vrot.lane.b32.xlu0 %v344, 126
        %v349 = vpop.permute.xlu0 %348
        %350 = vrot.lane.b32.xlu0 %v345, 126
        %v351 = vpop.permute.xlu0 %350
        %v354 = vadd.f32 %v302, %v349
        %v355 = vadd.f32 %v303, %v351
        %s356 = sld [smem:[#allocation8 + $0x4a]]
        %v357 = vstv %s356
        %v358 = vmul.f32 %v357, %v294
        %v359 = vmul.f32 %v357, %v295
        %362 = vrot.lane.b32.xlu0 %v358, 126
        %v363 = vpop.permute.xlu0 %362
        %364 = vrot.lane.b32.xlu0 %v359, 126
        %v365 = vpop.permute.xlu0 %364
        %v368 = vadd.f32 %v306, %v363
        %v369 = vadd.f32 %v307, %v365
        %s370 = sld [smem:[#allocation8 + $0x6e]]
        %v371 = vstv %s370
        %v372 = vmul.f32 %v371, %v294
        %v373 = vmul.f32 %v371, %v295
        %376 = vrot.lane.b32.xlu0 %v372, 126
        %v377 = vpop.permute.xlu0 %376
        %378 = vrot.lane.b32.xlu0 %v373, 126
        %v379 = vpop.permute.xlu0 %378
        %v382 = vadd.f32 %v310, %v377
        %v383 = vadd.f32 %v311, %v379
        %v384 = vld [vmem:[#allocation2 + $0x1] sm:$0xff]
        %v385 = vld [vmem:[#allocation2 + $0x9] sm:$0xff]
        %s386 = sld [smem:[#allocation8 + $0x3]]
        %v387 = vstv %s386
        %v388 = vmul.f32 %v387, %v384
        %v389 = vmul.f32 %v387, %v385
        %392 = vrot.lane.b32.xlu0 %v388, 1
        %v393 = vpop.permute.xlu0 %392
        %394 = vrot.lane.b32.xlu0 %v389, 1
        %v395 = vpop.permute.xlu0 %394
        %v398 = vadd.f32 %v314, %v393
        %v399 = vadd.f32 %v315, %v395
        %s400 = sld [smem:[#allocation8 + $0x27]]
        %v401 = vstv %s400
        %v402 = vmul.f32 %v401, %v384
        %v403 = vmul.f32 %v401, %v385
        %406 = vrot.lane.b32.xlu0 %v402, 1
        %v407 = vpop.permute.xlu0 %406
        %408 = vrot.lane.b32.xlu0 %v403, 1
        %v409 = vpop.permute.xlu0 %408
        %v412 = vadd.f32 %v318, %v407
        %v413 = vadd.f32 %v319, %v409
        %s414 = sld [smem:[#allocation8 + $0x4b]]
        %v415 = vstv %s414
        %v416 = vmul.f32 %v415, %v384
        %v417 = vmul.f32 %v415, %v385
        %420 = vrot.lane.b32.xlu0 %v416, 1
        %v421 = vpop.permute.xlu0 %420
        %422 = vrot.lane.b32.xlu0 %v417, 1
        %v423 = vpop.permute.xlu0 %422
        %v426 = vadd.f32 %v322, %v421
        %v427 = vadd.f32 %v323, %v423
        %s428 = sld [smem:[#allocation8 + $0x6f]]
        %v429 = vstv %s428
        %v430 = vmul.f32 %v429, %v384
        %v431 = vmul.f32 %v429, %v385
        %434 = vrot.lane.b32.xlu0 %v430, 1
        %v435 = vpop.permute.xlu0 %434
        %436 = vrot.lane.b32.xlu0 %v431, 1
        %v437 = vpop.permute.xlu0 %436
        %v440 = vadd.f32 %v326, %v435
        %v441 = vadd.f32 %v327, %v437
        %s442 = sld [smem:[#allocation8 + $0x4]]
        %v443 = vstv %s442
        %v444 = vmul.f32 %v443, %v384
        %v445 = vmul.f32 %v443, %v385
        %448 = vrot.lane.b32.xlu0 %v444, 127
        %v449 = vpop.permute.xlu0 %448
        %450 = vrot.lane.b32.xlu0 %v445, 127
        %v451 = vpop.permute.xlu0 %450
        %v454 = vadd.f32 %v340, %v449
        %v455 = vadd.f32 %v341, %v451
        %s456 = sld [smem:[#allocation8 + $0x28]]
        %v457 = vstv %s456
        %v458 = vmul.f32 %v457, %v384
        %v459 = vmul.f32 %v457, %v385
        %462 = vrot.lane.b32.xlu0 %v458, 127
        %v463 = vpop.permute.xlu0 %462
        %464 = vrot.lane.b32.xlu0 %v459, 127
        %v465 = vpop.permute.xlu0 %464
        %v468 = vadd.f32 %v354, %v463
        %v469 = vadd.f32 %v355, %v465
        %s470 = sld [smem:[#allocation8 + $0x4c]]
        %v471 = vstv %s470
        %v472 = vmul.f32 %v471, %v384
        %v473 = vmul.f32 %v471, %v385
        %476 = vrot.lane.b32.xlu0 %v472, 127
        %v477 = vpop.permute.xlu0 %476
        %478 = vrot.lane.b32.xlu0 %v473, 127
        %v479 = vpop.permute.xlu0 %478
        %v482 = vadd.f32 %v368, %v477
        %v483 = vadd.f32 %v369, %v479
        %s484 = sld [smem:[#allocation8 + $0x70]]
        %v485 = vstv %s484
        %v486 = vmul.f32 %v485, %v384
        %v487 = vmul.f32 %v485, %v385
        %490 = vrot.lane.b32.xlu0 %v486, 127
        %v491 = vpop.permute.xlu0 %490
        %492 = vrot.lane.b32.xlu0 %v487, 127
        %v493 = vpop.permute.xlu0 %492
        %v496 = vadd.f32 %v382, %v491
        %v497 = vadd.f32 %v383, %v493
        %s498 = sld [smem:[#allocation8 + $0x5]]
        %v499 = vstv %s498
        %v500 = vmul.f32 %v499, %v384
        %v501 = vmul.f32 %v499, %v385
        %504 = vrot.lane.b32.xlu0 %v500, 127
        %v505 = vpop.permute.xlu0 %504
        %506 = vrot.lane.b32.xlu0 %v501, 127
        %v507 = vpop.permute.xlu0 %506
        %v510 = vadd.f32 %v398, %v505
        %v511 = vadd.f32 %v399, %v507
        %s512 = sld [smem:[#allocation8 + $0x29]]
        %v513 = vstv %s512
        %v514 = vmul.f32 %v513, %v384
        %v515 = vmul.f32 %v513, %v385
        %518 = vrot.lane.b32.xlu0 %v514, 127
        %v519 = vpop.permute.xlu0 %518
        %520 = vrot.lane.b32.xlu0 %v515, 127
        %v521 = vpop.permute.xlu0 %520
        %v524 = vadd.f32 %v412, %v519
        %v525 = vadd.f32 %v413, %v521
        %s526 = sld [smem:[#allocation8 + $0x4d]]
        %v527 = vstv %s526
        %v528 = vmul.f32 %v527, %v384
        %v529 = vmul.f32 %v527, %v385
        %532 = vrot.lane.b32.xlu0 %v528, 127
        %v533 = vpop.permute.xlu0 %532
        %534 = vrot.lane.b32.xlu0 %v529, 127
        %v535 = vpop.permute.xlu0 %534
        %v538 = vadd.f32 %v426, %v533
        %v539 = vadd.f32 %v427, %v535
        %s540 = sld [smem:[#allocation8 + $0x71]]
        %v541 = vstv %s540
        %v542 = vmul.f32 %v541, %v384
        %v543 = vmul.f32 %v541, %v385
        %546 = vrot.lane.b32.xlu0 %v542, 127
        %v547 = vpop.permute.xlu0 %546
        %548 = vrot.lane.b32.xlu0 %v543, 127
        %v549 = vpop.permute.xlu0 %548
        %v552 = vadd.f32 %v440, %v547
        %v553 = vadd.f32 %v441, %v549
        %v554 = vld [vmem:[#allocation2 + $0x2] sm:$0xff]
        %v555 = vld [vmem:[#allocation2 + $0xa] sm:$0xff]
        %s556 = sld [smem:[#allocation8 + $0x6]]
        %v557 = vstv %s556
        %v558 = vmul.f32 %v557, %v554
        %v559 = vmul.f32 %v557, %v555
        %v560 = vadd.f32 %v454, %v558
        %v561 = vadd.f32 %v455, %v559
        %s562 = sld [smem:[#allocation8 + $0x2a]]
        %v563 = vstv %s562
        %v564 = vmul.f32 %v563, %v554
        %v565 = vmul.f32 %v563, %v555
        %v566 = vadd.f32 %v468, %v564
        %v567 = vadd.f32 %v469, %v565
        %s568 = sld [smem:[#allocation8 + $0x4e]]
        %v569 = vstv %s568
        %v570 = vmul.f32 %v569, %v554
        %v571 = vmul.f32 %v569, %v555
        %v572 = vadd.f32 %v482, %v570
        %v573 = vadd.f32 %v483, %v571
        %s574 = sld [smem:[#allocation8 + $0x72]]
        %v575 = vstv %s574
        %v576 = vmul.f32 %v575, %v554
        %v577 = vmul.f32 %v575, %v555
        %v578 = vadd.f32 %v496, %v576
        %v579 = vadd.f32 %v497, %v577
        %s580 = sld [smem:[#allocation8 + $0x7]]
        %v581 = vstv %s580
        %v582 = vmul.f32 %v581, %v554
        %v583 = vmul.f32 %v581, %v555
        %v584 = vadd.f32 %v510, %v582
        %v585 = vadd.f32 %v511, %v583
        %s586 = sld [smem:[#allocation8 + $0x2b]]
        %v587 = vstv %s586
        %v588 = vmul.f32 %v587, %v554
        %v589 = vmul.f32 %v587, %v555
        %v590 = vadd.f32 %v524, %v588
        %v591 = vadd.f32 %v525, %v589
        %s592 = sld [smem:[#allocation8 + $0x4f]]
        %v593 = vstv %s592
        %v594 = vmul.f32 %v593, %v554
        %v595 = vmul.f32 %v593, %v555
        %v596 = vadd.f32 %v538, %v594
        %v597 = vadd.f32 %v539, %v595
        %s598 = sld [smem:[#allocation8 + $0x73]]
        %v599 = vstv %s598
        %v600 = vmul.f32 %v599, %v554
        %v601 = vmul.f32 %v599, %v555
        %v602 = vadd.f32 %v552, %v600
        %v603 = vadd.f32 %v553, %v601
        %s604 = sld [smem:[#allocation8 + $0x8]]
        %v605 = vstv %s604
        %v606 = vmul.f32 %v605, %v554
        %v607 = vmul.f32 %v605, %v555
        %610 = vrot.lane.b32.xlu0 %v606, 126
        %v611 = vpop.permute.xlu0 %610
        %612 = vrot.lane.b32.xlu0 %v607, 126
        %v613 = vpop.permute.xlu0 %612
        %v616 = vadd.f32 %v560, %v611
        %v617 = vadd.f32 %v561, %v613
        %s618 = sld [smem:[#allocation8 + $0x2c]]
        %v619 = vstv %s618
        %v620 = vmul.f32 %v619, %v554
        %v621 = vmul.f32 %v619, %v555
        %624 = vrot.lane.b32.xlu0 %v620, 126
        %v625 = vpop.permute.xlu0 %624
        %626 = vrot.lane.b32.xlu0 %v621, 126
        %v627 = vpop.permute.xlu0 %626
        %v630 = vadd.f32 %v566, %v625
        %v631 = vadd.f32 %v567, %v627
        %s632 = sld [smem:[#allocation8 + $0x50]]
        %v633 = vstv %s632
        %v634 = vmul.f32 %v633, %v554
        %v635 = vmul.f32 %v633, %v555
        %638 = vrot.lane.b32.xlu0 %v634, 126
        %v639 = vpop.permute.xlu0 %638
        %640 = vrot.lane.b32.xlu0 %v635, 126
        %v641 = vpop.permute.xlu0 %640
        %v644 = vadd.f32 %v572, %v639
        %v645 = vadd.f32 %v573, %v641
        %s646 = sld [smem:[#allocation8 + $0x74]]
        %v647 = vstv %s646
        %v648 = vmul.f32 %v647, %v554
        %v649 = vmul.f32 %v647, %v555
        %652 = vrot.lane.b32.xlu0 %v648, 126
        %v653 = vpop.permute.xlu0 %652
        %654 = vrot.lane.b32.xlu0 %v649, 126
        %v655 = vpop.permute.xlu0 %654
        %v658 = vadd.f32 %v578, %v653
        %v659 = vadd.f32 %v579, %v655
        %s660 = scalar_lea.vmem [#allocation2], 24
        %v661 = vld [vmem:[%s660] sm:$0xff]
        %v662 = vld [vmem:[%s660 + $0x8] sm:$0xff]
        %s663 = sld [smem:[#allocation8 + $0x9]]
        %v664 = vstv %s663
        %v665 = vmul.f32 %v664, %v661
        %v666 = vmul.f32 %v664, %v662
        %669 = vrot.lane.b32.xlu0 %v665, 1
        %v670 = vpop.permute.xlu0 %669
        %671 = vrot.lane.b32.xlu0 %v666, 1
        %v672 = vpop.permute.xlu0 %671
        %v675 = vadd.f32 %v584, %v670
        %v676 = vadd.f32 %v585, %v672
        %s677 = sld [smem:[#allocation8 + $0x2d]]
        %v678 = vstv %s677
        %v679 = vmul.f32 %v678, %v661
        %v680 = vmul.f32 %v678, %v662
        %683 = vrot.lane.b32.xlu0 %v679, 1
        %v684 = vpop.permute.xlu0 %683
        %685 = vrot.lane.b32.xlu0 %v680, 1
        %v686 = vpop.permute.xlu0 %685
        %v689 = vadd.f32 %v590, %v684
        %v690 = vadd.f32 %v591, %v686
        %s691 = sld [smem:[#allocation8 + $0x51]]
        %v692 = vstv %s691
        %v693 = vmul.f32 %v692, %v661
        %v694 = vmul.f32 %v692, %v662
        %697 = vrot.lane.b32.xlu0 %v693, 1
        %v698 = vpop.permute.xlu0 %697
        %699 = vrot.lane.b32.xlu0 %v694, 1
        %v700 = vpop.permute.xlu0 %699
        %v703 = vadd.f32 %v596, %v698
        %v704 = vadd.f32 %v597, %v700
        %s705 = sld [smem:[#allocation8 + $0x75]]
        %v706 = vstv %s705
        %v707 = vmul.f32 %v706, %v661
        %v708 = vmul.f32 %v706, %v662
        %711 = vrot.lane.b32.xlu0 %v707, 1
        %v712 = vpop.permute.xlu0 %711
        %713 = vrot.lane.b32.xlu0 %v708, 1
        %v714 = vpop.permute.xlu0 %713
        %v717 = vadd.f32 %v602, %v712
        %v718 = vadd.f32 %v603, %v714
        %s719 = sld [smem:[#allocation8 + $0xa]]
        %v720 = vstv %s719
        %v721 = vmul.f32 %v720, %v661
        %v722 = vmul.f32 %v720, %v662
        %725 = vrot.lane.b32.xlu0 %v721, 127
        %v726 = vpop.permute.xlu0 %725
        %727 = vrot.lane.b32.xlu0 %v722, 127
        %v728 = vpop.permute.xlu0 %727
        %v731 = vadd.f32 %v616, %v726
        %v732 = vadd.f32 %v617, %v728
        %s733 = sld [smem:[#allocation8 + $0x2e]]
        %v734 = vstv %s733
        %v735 = vmul.f32 %v734, %v661
        %v736 = vmul.f32 %v734, %v662
        %739 = vrot.lane.b32.xlu0 %v735, 127
        %v740 = vpop.permute.xlu0 %739
        %741 = vrot.lane.b32.xlu0 %v736, 127
        %v742 = vpop.permute.xlu0 %741
        %v745 = vadd.f32 %v630, %v740
        %v746 = vadd.f32 %v631, %v742
        %s747 = sld [smem:[#allocation8 + $0x52]]
        %v748 = vstv %s747
        %v749 = vmul.f32 %v748, %v661
        %v750 = vmul.f32 %v748, %v662
        %753 = vrot.lane.b32.xlu0 %v749, 127
        %v754 = vpop.permute.xlu0 %753
        %755 = vrot.lane.b32.xlu0 %v750, 127
        %v756 = vpop.permute.xlu0 %755
        %v759 = vadd.f32 %v644, %v754
        %v760 = vadd.f32 %v645, %v756
        %s761 = sld [smem:[#allocation8 + $0x76]]
        %v762 = vstv %s761
        %v763 = vmul.f32 %v762, %v661
        %v764 = vmul.f32 %v762, %v662
        %767 = vrot.lane.b32.xlu0 %v763, 127
        %v768 = vpop.permute.xlu0 %767
        %769 = vrot.lane.b32.xlu0 %v764, 127
        %v770 = vpop.permute.xlu0 %769
        %v773 = vadd.f32 %v658, %v768
        %v774 = vadd.f32 %v659, %v770
        %s775 = sld [smem:[#allocation8 + $0xb]]
        %v776 = vstv %s775
        %v777 = vmul.f32 %v776, %v661
        %v778 = vmul.f32 %v776, %v662
        %781 = vrot.lane.b32.xlu0 %v777, 127
        %v782 = vpop.permute.xlu0 %781
        %783 = vrot.lane.b32.xlu0 %v778, 127
        %v784 = vpop.permute.xlu0 %783
        %v787 = vadd.f32 %v675, %v782
        %v788 = vadd.f32 %v676, %v784
        %s789 = sld [smem:[#allocation8 + $0x2f]]
        %v790 = vstv %s789
        %v791 = vmul.f32 %v790, %v661
        %v792 = vmul.f32 %v790, %v662
        %795 = vrot.lane.b32.xlu0 %v791, 127
        %v796 = vpop.permute.xlu0 %795
        %797 = vrot.lane.b32.xlu0 %v792, 127
        %v798 = vpop.permute.xlu0 %797
        %v801 = vadd.f32 %v689, %v796
        %v802 = vadd.f32 %v690, %v798
        %s803 = sld [smem:[#allocation8 + $0x53]]
        %v804 = vstv %s803
        %v805 = vmul.f32 %v804, %v661
        %v806 = vmul.f32 %v804, %v662
        %809 = vrot.lane.b32.xlu0 %v805, 127
        %v810 = vpop.permute.xlu0 %809
        %811 = vrot.lane.b32.xlu0 %v806, 127
        %v812 = vpop.permute.xlu0 %811
        %v815 = vadd.f32 %v703, %v810
        %v816 = vadd.f32 %v704, %v812
        %s817 = sld [smem:[#allocation8 + $0x77]]
        %v818 = vstv %s817
        %v819 = vmul.f32 %v818, %v661
        %v820 = vmul.f32 %v818, %v662
        %823 = vrot.lane.b32.xlu0 %v819, 127
        %v824 = vpop.permute.xlu0 %823
        %825 = vrot.lane.b32.xlu0 %v820, 127
        %v826 = vpop.permute.xlu0 %825
        %v829 = vadd.f32 %v717, %v824
        %v830 = vadd.f32 %v718, %v826
        %v831 = vld [vmem:[%s660 + $0x1] sm:$0xff]
        %v832 = vld [vmem:[%s660 + $0x9] sm:$0xff]
        %s833 = sld [smem:[#allocation8 + $0xc]]
        %v834 = vstv %s833
        %v835 = vmul.f32 %v834, %v831
        %v836 = vmul.f32 %v834, %v832
        %v837 = vadd.f32 %v731, %v835
        %v838 = vadd.f32 %v732, %v836
        %s839 = sld [smem:[#allocation8 + $0x30]]
        %v840 = vstv %s839
        %v841 = vmul.f32 %v840, %v831
        %v842 = vmul.f32 %v840, %v832
        %v843 = vadd.f32 %v745, %v841
        %v844 = vadd.f32 %v746, %v842
        %s845 = sld [smem:[#allocation8 + $0x54]]
        %v846 = vstv %s845
        %v847 = vmul.f32 %v846, %v831
        %v848 = vmul.f32 %v846, %v832
        %v849 = vadd.f32 %v759, %v847
        %v850 = vadd.f32 %v760, %v848
        %s851 = sld [smem:[#allocation8 + $0x78]]
        %v852 = vstv %s851
        %v853 = vmul.f32 %v852, %v831
        %v854 = vmul.f32 %v852, %v832
        %v855 = vadd.f32 %v773, %v853
        %v856 = vadd.f32 %v774, %v854
        %s857 = sld [smem:[#allocation8 + $0xd]]
        %v858 = vstv %s857
        %v859 = vmul.f32 %v858, %v831
        %v860 = vmul.f32 %v858, %v832
        %v861 = vadd.f32 %v787, %v859
        %v862 = vadd.f32 %v788, %v860
        %s863 = sld [smem:[#allocation8 + $0x31]]
        %v864 = vstv %s863
        %v865 = vmul.f32 %v864, %v831
        %v866 = vmul.f32 %v864, %v832
        %v867 = vadd.f32 %v801, %v865
        %v868 = vadd.f32 %v802, %v866
        %s869 = sld [smem:[#allocation8 + $0x55]]
        %v870 = vstv %s869
        %v871 = vmul.f32 %v870, %v831
        %v872 = vmul.f32 %v870, %v832
        %v873 = vadd.f32 %v815, %v871
        %v874 = vadd.f32 %v816, %v872
        %s875 = sld [smem:[#allocation8 + $0x79]]
        %v876 = vstv %s875
        %v877 = vmul.f32 %v876, %v831
        %v878 = vmul.f32 %v876, %v832
        %v879 = vadd.f32 %v829, %v877
        %v880 = vadd.f32 %v830, %v878
        %s881 = sld [smem:[#allocation8 + $0xe]]
        %v882 = vstv %s881
        %v883 = vmul.f32 %v882, %v831
        %v884 = vmul.f32 %v882, %v832
        %887 = vrot.lane.b32.xlu0 %v883, 126
        %v888 = vpop.permute.xlu0 %887
        %889 = vrot.lane.b32.xlu0 %v884, 126
        %v890 = vpop.permute.xlu0 %889
        %v893 = vadd.f32 %v837, %v888
        %v894 = vadd.f32 %v838, %v890
        %s895 = sld [smem:[#allocation8 + $0x32]]
        %v896 = vstv %s895
        %v897 = vmul.f32 %v896, %v831
        %v898 = vmul.f32 %v896, %v832
        %901 = vrot.lane.b32.xlu0 %v897, 126
        %v902 = vpop.permute.xlu0 %901
        %903 = vrot.lane.b32.xlu0 %v898, 126
        %v904 = vpop.permute.xlu0 %903
        %v907 = vadd.f32 %v843, %v902
        %v908 = vadd.f32 %v844, %v904
        %s909 = sld [smem:[#allocation8 + $0x56]]
        %v910 = vstv %s909
        %v911 = vmul.f32 %v910, %v831
        %v912 = vmul.f32 %v910, %v832
        %915 = vrot.lane.b32.xlu0 %v911, 126
        %v916 = vpop.permute.xlu0 %915
        %917 = vrot.lane.b32.xlu0 %v912, 126
        %v918 = vpop.permute.xlu0 %917
        %v921 = vadd.f32 %v849, %v916
        %v922 = vadd.f32 %v850, %v918
        %s923 = sld [smem:[#allocation8 + $0x7a]]
        %v924 = vstv %s923
        %v925 = vmul.f32 %v924, %v831
        %v926 = vmul.f32 %v924, %v832
        %929 = vrot.lane.b32.xlu0 %v925, 126
        %v930 = vpop.permute.xlu0 %929
        %931 = vrot.lane.b32.xlu0 %v926, 126
        %v932 = vpop.permute.xlu0 %931
        %v935 = vadd.f32 %v855, %v930
        %v936 = vadd.f32 %v856, %v932
        %v937 = vld [vmem:[%s660 + $0x2] sm:$0xff]
        %v938 = vld [vmem:[%s660 + $0xa] sm:$0xff]
        %s939 = sld [smem:[#allocation8 + $0xf]]
        %v940 = vstv %s939
        %v941 = vmul.f32 %v940, %v937
        %v942 = vmul.f32 %v940, %v938
        %945 = vrot.lane.b32.xlu0 %v941, 1
        %v946 = vpop.permute.xlu0 %945
        %947 = vrot.lane.b32.xlu0 %v942, 1
        %v948 = vpop.permute.xlu0 %947
        %v951 = vadd.f32 %v861, %v946
        %v952 = vadd.f32 %v862, %v948
        %s953 = sld [smem:[#allocation8 + $0x33]]
        %v954 = vstv %s953
        %v955 = vmul.f32 %v954, %v937
        %v956 = vmul.f32 %v954, %v938
        %959 = vrot.lane.b32.xlu0 %v955, 1
        %v960 = vpop.permute.xlu0 %959
        %961 = vrot.lane.b32.xlu0 %v956, 1
        %v962 = vpop.permute.xlu0 %961
        %v965 = vadd.f32 %v867, %v960
        %v966 = vadd.f32 %v868, %v962
        %s967 = sld [smem:[#allocation8 + $0x57]]
        %v968 = vstv %s967
        %v969 = vmul.f32 %v968, %v937
        %v970 = vmul.f32 %v968, %v938
        %973 = vrot.lane.b32.xlu0 %v969, 1
        %v974 = vpop.permute.xlu0 %973
        %975 = vrot.lane.b32.xlu0 %v970, 1
        %v976 = vpop.permute.xlu0 %975
        %v979 = vadd.f32 %v873, %v974
        %v980 = vadd.f32 %v874, %v976
        %s981 = sld [smem:[#allocation8 + $0x7b]]
        %v982 = vstv %s981
        %v983 = vmul.f32 %v982, %v937
        %v984 = vmul.f32 %v982, %v938
        %987 = vrot.lane.b32.xlu0 %v983, 1
        %v988 = vpop.permute.xlu0 %987
        %989 = vrot.lane.b32.xlu0 %v984, 1
        %v990 = vpop.permute.xlu0 %989
        %v993 = vadd.f32 %v879, %v988
        %v994 = vadd.f32 %v880, %v990
        %s995 = sld [smem:[#allocation8 + $0x10]]
        %v996 = vstv %s995
        %v997 = vmul.f32 %v996, %v937
        %v998 = vmul.f32 %v996, %v938
        %1001 = vrot.lane.b32.xlu0 %v997, 127
        %v1002 = vpop.permute.xlu0 %1001
        %1003 = vrot.lane.b32.xlu0 %v998, 127
        %v1004 = vpop.permute.xlu0 %1003
        %v1007 = vadd.f32 %v893, %v1002
        %v1008 = vadd.f32 %v894, %v1004
        %s1009 = sld [smem:[#allocation8 + $0x34]]
        %v1010 = vstv %s1009
        %v1011 = vmul.f32 %v1010, %v937
        %v1012 = vmul.f32 %v1010, %v938
        %1015 = vrot.lane.b32.xlu0 %v1011, 127
        %v1016 = vpop.permute.xlu0 %1015
        %1017 = vrot.lane.b32.xlu0 %v1012, 127
        %v1018 = vpop.permute.xlu0 %1017
        %v1021 = vadd.f32 %v907, %v1016
        %v1022 = vadd.f32 %v908, %v1018
        %s1023 = sld [smem:[#allocation8 + $0x58]]
        %v1024 = vstv %s1023
        %v1025 = vmul.f32 %v1024, %v937
        %v1026 = vmul.f32 %v1024, %v938
        %1029 = vrot.lane.b32.xlu0 %v1025, 127
        %v1030 = vpop.permute.xlu0 %1029
        %1031 = vrot.lane.b32.xlu0 %v1026, 127
        %v1032 = vpop.permute.xlu0 %1031
        %v1035 = vadd.f32 %v921, %v1030
        %v1036 = vadd.f32 %v922, %v1032
        %s1037 = sld [smem:[#allocation8 + $0x7c]]
        %v1038 = vstv %s1037
        %v1039 = vmul.f32 %v1038, %v937
        %v1040 = vmul.f32 %v1038, %v938
        %1043 = vrot.lane.b32.xlu0 %v1039, 127
        %v1044 = vpop.permute.xlu0 %1043
        %1045 = vrot.lane.b32.xlu0 %v1040, 127
        %v1046 = vpop.permute.xlu0 %1045
        %v1049 = vadd.f32 %v935, %v1044
        %v1050 = vadd.f32 %v936, %v1046
        %s1051 = sld [smem:[#allocation8 + $0x11]]
        %v1052 = vstv %s1051
        %v1053 = vmul.f32 %v1052, %v937
        %v1054 = vmul.f32 %v1052, %v938
        %1057 = vrot.lane.b32.xlu0 %v1053, 127
        %v1058 = vpop.permute.xlu0 %1057
        %1059 = vrot.lane.b32.xlu0 %v1054, 127
        %v1060 = vpop.permute.xlu0 %1059
        %v1063 = vadd.f32 %v951, %v1058
        %v1064 = vadd.f32 %v952, %v1060
        %s1065 = sld [smem:[#allocation8 + $0x35]]
        %v1066 = vstv %s1065
        %v1067 = vmul.f32 %v1066, %v937
        %v1068 = vmul.f32 %v1066, %v938
        %1071 = vrot.lane.b32.xlu0 %v1067, 127
        %v1072 = vpop.permute.xlu0 %1071
        %1073 = vrot.lane.b32.xlu0 %v1068, 127
        %v1074 = vpop.permute.xlu0 %1073
        %v1077 = vadd.f32 %v965, %v1072
        %v1078 = vadd.f32 %v966, %v1074
        %s1079 = sld [smem:[#allocation8 + $0x59]]
        %v1080 = vstv %s1079
        %v1081 = vmul.f32 %v1080, %v937
        %v1082 = vmul.f32 %v1080, %v938
        %1085 = vrot.lane.b32.xlu0 %v1081, 127
        %v1086 = vpop.permute.xlu0 %1085
        %1087 = vrot.lane.b32.xlu0 %v1082, 127
        %v1088 = vpop.permute.xlu0 %1087
        %v1091 = vadd.f32 %v979, %v1086
        %v1092 = vadd.f32 %v980, %v1088
        %s1093 = sld [smem:[#allocation8 + $0x7d]]
        %v1094 = vstv %s1093
        %v1095 = vmul.f32 %v1094, %v937
        %v1096 = vmul.f32 %v1094, %v938
        %1099 = vrot.lane.b32.xlu0 %v1095, 127
        %v1100 = vpop.permute.xlu0 %1099
        %1101 = vrot.lane.b32.xlu0 %v1096, 127
        %v1102 = vpop.permute.xlu0 %1101
        %v1105 = vadd.f32 %v993, %v1100
        %v1106 = vadd.f32 %v994, %v1102
        %s1107 = scalar_lea.vmem [#allocation2], 48
        %v1108 = vld [vmem:[%s1107] sm:$0xff]
        %v1109 = vld [vmem:[%s1107 + $0x8] sm:$0xff]
        %s1110 = sld [smem:[#allocation8 + $0x12]]
        %v1111 = vstv %s1110
        %v1112 = vmul.f32 %v1111, %v1108
        %v1113 = vmul.f32 %v1111, %v1109
        %v1114 = vadd.f32 %v1007, %v1112
        %v1115 = vadd.f32 %v1008, %v1113
        %s1116 = sld [smem:[#allocation8 + $0x36]]
        %v1117 = vstv %s1116
        %v1118 = vmul.f32 %v1117, %v1108
        %v1119 = vmul.f32 %v1117, %v1109
        %v1120 = vadd.f32 %v1021, %v1118
        %v1121 = vadd.f32 %v1022, %v1119
        %s1122 = sld [smem:[#allocation8 + $0x5a]]
        %v1123 = vstv %s1122
        %v1124 = vmul.f32 %v1123, %v1108
        %v1125 = vmul.f32 %v1123, %v1109
        %v1126 = vadd.f32 %v1035, %v1124
        %v1127 = vadd.f32 %v1036, %v1125
        %s1128 = sld [smem:[#allocation8 + $0x7e]]
        %v1129 = vstv %s1128
        %v1130 = vmul.f32 %v1129, %v1108
        %v1131 = vmul.f32 %v1129, %v1109
        %v1132 = vadd.f32 %v1049, %v1130
        %v1133 = vadd.f32 %v1050, %v1131
        %s1134 = sld [smem:[#allocation8 + $0x13]]
        %v1135 = vstv %s1134
        %v1136 = vmul.f32 %v1135, %v1108
        %v1137 = vmul.f32 %v1135, %v1109
        %v1138 = vadd.f32 %v1063, %v1136
        %v1139 = vadd.f32 %v1064, %v1137
        %s1140 = sld [smem:[#allocation8 + $0x37]]
        %v1141 = vstv %s1140
        %v1142 = vmul.f32 %v1141, %v1108
        %v1143 = vmul.f32 %v1141, %v1109
        %v1144 = vadd.f32 %v1077, %v1142
        %v1145 = vadd.f32 %v1078, %v1143
        %s1146 = sld [smem:[#allocation8 + $0x5b]]
        %v1147 = vstv %s1146
        %v1148 = vmul.f32 %v1147, %v1108
        %v1149 = vmul.f32 %v1147, %v1109
        %v1150 = vadd.f32 %v1091, %v1148
        %v1151 = vadd.f32 %v1092, %v1149
        %s1152 = sld [smem:[#allocation8 + $0x7f]]
        %v1153 = vstv %s1152
        %v1154 = vmul.f32 %v1153, %v1108
        %v1155 = vmul.f32 %v1153, %v1109
        %v1156 = vadd.f32 %v1105, %v1154
        %v1157 = vadd.f32 %v1106, %v1155
        %s1158 = sld [smem:[#allocation8 + $0x14]]
        %v1159 = vstv %s1158
        %v1160 = vmul.f32 %v1159, %v1108
        %v1161 = vmul.f32 %v1159, %v1109
        %1164 = vrot.lane.b32.xlu0 %v1160, 126
        %v1165 = vpop.permute.xlu0 %1164
        %1166 = vrot.lane.b32.xlu0 %v1161, 126
        %v1167 = vpop.permute.xlu0 %1166
        %v1170 = vadd.f32 %v1114, %v1165
        %v1171 = vadd.f32 %v1115, %v1167
        %s1172 = sld [smem:[#allocation8 + $0x38]]
        %v1173 = vstv %s1172
        %v1174 = vmul.f32 %v1173, %v1108
        %v1175 = vmul.f32 %v1173, %v1109
        %1178 = vrot.lane.b32.xlu0 %v1174, 126
        %v1179 = vpop.permute.xlu0 %1178
        %1180 = vrot.lane.b32.xlu0 %v1175, 126
        %v1181 = vpop.permute.xlu0 %1180
        %v1184 = vadd.f32 %v1120, %v1179
        %v1185 = vadd.f32 %v1121, %v1181
        %s1186 = sld [smem:[#allocation8 + $0x5c]]
        %v1187 = vstv %s1186
        %v1188 = vmul.f32 %v1187, %v1108
        %v1189 = vmul.f32 %v1187, %v1109
        %1192 = vrot.lane.b32.xlu0 %v1188, 126
        %v1193 = vpop.permute.xlu0 %1192
        %1194 = vrot.lane.b32.xlu0 %v1189, 126
        %v1195 = vpop.permute.xlu0 %1194
        %v1198 = vadd.f32 %v1126, %v1193
        %v1199 = vadd.f32 %v1127, %v1195
        %s1200 = sld [smem:[#allocation8 + $0x80]]
        %v1201 = vstv %s1200
        %v1202 = vmul.f32 %v1201, %v1108
        %v1203 = vmul.f32 %v1201, %v1109
        %1206 = vrot.lane.b32.xlu0 %v1202, 126
        %v1207 = vpop.permute.xlu0 %1206
        %1208 = vrot.lane.b32.xlu0 %v1203, 126
        %v1209 = vpop.permute.xlu0 %1208
        %v1212 = vadd.f32 %v1132, %v1207
        %v1213 = vadd.f32 %v1133, %v1209
        %v1214 = vld [vmem:[%s1107 + $0x1] sm:$0xff]
        %v1215 = vld [vmem:[%s1107 + $0x9] sm:$0xff]
        %s1216 = sld [smem:[#allocation8 + $0x15]]
        %v1217 = vstv %s1216
        %v1218 = vmul.f32 %v1217, %v1214
        %v1219 = vmul.f32 %v1217, %v1215
        %1222 = vrot.lane.b32.xlu0 %v1218, 1
        %v1223 = vpop.permute.xlu0 %1222
        %1224 = vrot.lane.b32.xlu0 %v1219, 1
        %v1225 = vpop.permute.xlu0 %1224
        %v1228 = vadd.f32 %v1138, %v1223
        %v1229 = vadd.f32 %v1139, %v1225
        %s1230 = sld [smem:[#allocation8 + $0x39]]
        %v1231 = vstv %s1230
        %v1232 = vmul.f32 %v1231, %v1214
        %v1233 = vmul.f32 %v1231, %v1215
        %1236 = vrot.lane.b32.xlu0 %v1232, 1
        %v1237 = vpop.permute.xlu0 %1236
        %1238 = vrot.lane.b32.xlu0 %v1233, 1
        %v1239 = vpop.permute.xlu0 %1238
        %v1242 = vadd.f32 %v1144, %v1237
        %v1243 = vadd.f32 %v1145, %v1239
        %s1244 = sld [smem:[#allocation8 + $0x5d]]
        %v1245 = vstv %s1244
        %v1246 = vmul.f32 %v1245, %v1214
        %v1247 = vmul.f32 %v1245, %v1215
        %1250 = vrot.lane.b32.xlu0 %v1246, 1
        %v1251 = vpop.permute.xlu0 %1250
        %1252 = vrot.lane.b32.xlu0 %v1247, 1
        %v1253 = vpop.permute.xlu0 %1252
        %v1256 = vadd.f32 %v1150, %v1251
        %v1257 = vadd.f32 %v1151, %v1253
        %s1258 = sld [smem:[#allocation8 + $0x81]]
        %v1259 = vstv %s1258
        %v1260 = vmul.f32 %v1259, %v1214
        %v1261 = vmul.f32 %v1259, %v1215
        %1264 = vrot.lane.b32.xlu0 %v1260, 1
        %v1265 = vpop.permute.xlu0 %1264
        %1266 = vrot.lane.b32.xlu0 %v1261, 1
        %v1267 = vpop.permute.xlu0 %1266
        %v1270 = vadd.f32 %v1156, %v1265
        %v1271 = vadd.f32 %v1157, %v1267
        %s1272 = sld [smem:[#allocation8 + $0x16]]
        %v1273 = vstv %s1272
        %v1274 = vmul.f32 %v1273, %v1214
        %v1275 = vmul.f32 %v1273, %v1215
        %1278 = vrot.lane.b32.xlu0 %v1274, 127
        %v1279 = vpop.permute.xlu0 %1278
        %1280 = vrot.lane.b32.xlu0 %v1275, 127
        %v1281 = vpop.permute.xlu0 %1280
        %v1284 = vadd.f32 %v1170, %v1279
        %v1285 = vadd.f32 %v1171, %v1281
        %s1286 = sld [smem:[#allocation8 + $0x3a]]
        %v1287 = vstv %s1286
        %v1288 = vmul.f32 %v1287, %v1214
        %v1289 = vmul.f32 %v1287, %v1215
        %1292 = vrot.lane.b32.xlu0 %v1288, 127
        %v1293 = vpop.permute.xlu0 %1292
        %1294 = vrot.lane.b32.xlu0 %v1289, 127
        %v1295 = vpop.permute.xlu0 %1294
        %v1298 = vadd.f32 %v1184, %v1293
        %v1299 = vadd.f32 %v1185, %v1295
        %s1300 = sld [smem:[#allocation8 + $0x5e]]
        %v1301 = vstv %s1300
        %v1302 = vmul.f32 %v1301, %v1214
        %v1303 = vmul.f32 %v1301, %v1215
        %1306 = vrot.lane.b32.xlu0 %v1302, 127
        %v1307 = vpop.permute.xlu0 %1306
        %1308 = vrot.lane.b32.xlu0 %v1303, 127
        %v1309 = vpop.permute.xlu0 %1308
        %v1312 = vadd.f32 %v1198, %v1307
        %v1313 = vadd.f32 %v1199, %v1309
        %s1314 = sld [smem:[#allocation8 + $0x82]]
        %v1315 = vstv %s1314
        %v1316 = vmul.f32 %v1315, %v1214
        %v1317 = vmul.f32 %v1315, %v1215
        %1320 = vrot.lane.b32.xlu0 %v1316, 127
        %v1321 = vpop.permute.xlu0 %1320
        %1322 = vrot.lane.b32.xlu0 %v1317, 127
        %v1323 = vpop.permute.xlu0 %1322
        %v1326 = vadd.f32 %v1212, %v1321
        %v1327 = vadd.f32 %v1213, %v1323
        %s1328 = sld [smem:[#allocation8 + $0x17]]
        %v1329 = vstv %s1328
        %v1330 = vmul.f32 %v1329, %v1214
        %v1331 = vmul.f32 %v1329, %v1215
        %1334 = vrot.lane.b32.xlu0 %v1330, 127
        %v1335 = vpop.permute.xlu0 %1334
        %1336 = vrot.lane.b32.xlu0 %v1331, 127
        %v1337 = vpop.permute.xlu0 %1336
        %v1340 = vadd.f32 %v1228, %v1335
        %v1341 = vadd.f32 %v1229, %v1337
        %s1342 = sld [smem:[#allocation8 + $0x3b]]
        %v1343 = vstv %s1342
        %v1344 = vmul.f32 %v1343, %v1214
        %v1345 = vmul.f32 %v1343, %v1215
        %1348 = vrot.lane.b32.xlu0 %v1344, 127
        %v1349 = vpop.permute.xlu0 %1348
        %1350 = vrot.lane.b32.xlu0 %v1345, 127
        %v1351 = vpop.permute.xlu0 %1350
        %v1354 = vadd.f32 %v1242, %v1349
        %v1355 = vadd.f32 %v1243, %v1351
        %s1356 = sld [smem:[#allocation8 + $0x5f]]
        %v1357 = vstv %s1356
        %v1358 = vmul.f32 %v1357, %v1214
        %v1359 = vmul.f32 %v1357, %v1215
        %1362 = vrot.lane.b32.xlu0 %v1358, 127
        %v1363 = vpop.permute.xlu0 %1362
        %1364 = vrot.lane.b32.xlu0 %v1359, 127
        %v1365 = vpop.permute.xlu0 %1364
        %v1368 = vadd.f32 %v1256, %v1363
        %v1369 = vadd.f32 %v1257, %v1365
        %s1370 = sld [smem:[#allocation8 + $0x83]]
        %v1371 = vstv %s1370
        %v1372 = vmul.f32 %v1371, %v1214
        %v1373 = vmul.f32 %v1371, %v1215
        %1376 = vrot.lane.b32.xlu0 %v1372, 127
        %v1377 = vpop.permute.xlu0 %1376
        %1378 = vrot.lane.b32.xlu0 %v1373, 127
        %v1379 = vpop.permute.xlu0 %1378
        %v1382 = vadd.f32 %v1270, %v1377
        %v1383 = vadd.f32 %v1271, %v1379
        %v1384 = vld [vmem:[%s1107 + $0x2] sm:$0xff]
        %v1385 = vld [vmem:[%s1107 + $0xa] sm:$0xff]
        %s1386 = sld [smem:[#allocation8 + $0x18]]
        %v1387 = vstv %s1386
        %v1388 = vmul.f32 %v1387, %v1384
        %v1389 = vmul.f32 %v1387, %v1385
        %v1390 = vadd.f32 %v1284, %v1388
        %v1391 = vadd.f32 %v1285, %v1389
        %s1392 = sld [smem:[#allocation8 + $0x3c]]
        %v1393 = vstv %s1392
        %v1394 = vmul.f32 %v1393, %v1384
        %v1395 = vmul.f32 %v1393, %v1385
        %v1396 = vadd.f32 %v1298, %v1394
        %v1397 = vadd.f32 %v1299, %v1395
        %s1398 = sld [smem:[#allocation8 + $0x60]]
        %v1399 = vstv %s1398
        %v1400 = vmul.f32 %v1399, %v1384
        %v1401 = vmul.f32 %v1399, %v1385
        %v1402 = vadd.f32 %v1312, %v1400
        %v1403 = vadd.f32 %v1313, %v1401
        %s1404 = sld [smem:[#allocation8 + $0x84]]
        %v1405 = vstv %s1404
        %v1406 = vmul.f32 %v1405, %v1384
        %v1407 = vmul.f32 %v1405, %v1385
        %v1408 = vadd.f32 %v1326, %v1406
        %v1409 = vadd.f32 %v1327, %v1407
        %s1410 = sld [smem:[#allocation8 + $0x19]]
        %v1411 = vstv %s1410
        %v1412 = vmul.f32 %v1411, %v1384
        %v1413 = vmul.f32 %v1411, %v1385
        %v1414 = vadd.f32 %v1340, %v1412
        %v1415 = vadd.f32 %v1341, %v1413
        %s1416 = sld [smem:[#allocation8 + $0x3d]]
        %v1417 = vstv %s1416
        %v1418 = vmul.f32 %v1417, %v1384
        %v1419 = vmul.f32 %v1417, %v1385
        %v1420 = vadd.f32 %v1354, %v1418
        %v1421 = vadd.f32 %v1355, %v1419
        %s1422 = sld [smem:[#allocation8 + $0x61]]
        %v1423 = vstv %s1422
        %v1424 = vmul.f32 %v1423, %v1384
        %v1425 = vmul.f32 %v1423, %v1385
        %v1426 = vadd.f32 %v1368, %v1424
        %v1427 = vadd.f32 %v1369, %v1425
        %s1428 = sld [smem:[#allocation8 + $0x85]]
        %v1429 = vstv %s1428
        %v1430 = vmul.f32 %v1429, %v1384
        %v1431 = vmul.f32 %v1429, %v1385
        %v1432 = vadd.f32 %v1382, %v1430
        %v1433 = vadd.f32 %v1383, %v1431
        %s1434 = sld [smem:[#allocation8 + $0x1a]]
        %v1435 = vstv %s1434
        %v1436 = vmul.f32 %v1435, %v1384
        %v1437 = vmul.f32 %v1435, %v1385
        %1440 = vrot.lane.b32.xlu0 %v1436, 126
        %v1441 = vpop.permute.xlu0 %1440
        %1442 = vrot.lane.b32.xlu0 %v1437, 126
        %v1443 = vpop.permute.xlu0 %1442
        %v1446 = vadd.f32 %v1390, %v1441
        %v1447 = vadd.f32 %v1391, %v1443
        %s1448 = sld [smem:[#allocation8 + $0x3e]]
        %v1449 = vstv %s1448
        %v1450 = vmul.f32 %v1449, %v1384
        %v1451 = vmul.f32 %v1449, %v1385
        %1454 = vrot.lane.b32.xlu0 %v1450, 126
        %v1455 = vpop.permute.xlu0 %1454
        %1456 = vrot.lane.b32.xlu0 %v1451, 126
        %v1457 = vpop.permute.xlu0 %1456
        %v1460 = vadd.f32 %v1396, %v1455
        %v1461 = vadd.f32 %v1397, %v1457
        %s1462 = sld [smem:[#allocation8 + $0x62]]
        %v1463 = vstv %s1462
        %v1464 = vmul.f32 %v1463, %v1384
        %v1465 = vmul.f32 %v1463, %v1385
        %1468 = vrot.lane.b32.xlu0 %v1464, 126
        %v1469 = vpop.permute.xlu0 %1468
        %1470 = vrot.lane.b32.xlu0 %v1465, 126
        %v1471 = vpop.permute.xlu0 %1470
        %v1474 = vadd.f32 %v1402, %v1469
        %v1475 = vadd.f32 %v1403, %v1471
        %s1476 = sld [smem:[#allocation8 + $0x86]]
        %v1477 = vstv %s1476
        %v1478 = vmul.f32 %v1477, %v1384
        %v1479 = vmul.f32 %v1477, %v1385
        %1482 = vrot.lane.b32.xlu0 %v1478, 126
        %v1483 = vpop.permute.xlu0 %1482
        %1484 = vrot.lane.b32.xlu0 %v1479, 126
        %v1485 = vpop.permute.xlu0 %1484
        %v1488 = vadd.f32 %v1408, %v1483
        %v1489 = vadd.f32 %v1409, %v1485
        %s1490 = scalar_lea.vmem [#allocation2], 72
        %v1491 = vld [vmem:[%s1490] sm:$0xff]
        %v1492 = vld [vmem:[%s1490 + $0x8] sm:$0xff]
        %s1493 = sld [smem:[#allocation8 + $0x1b]]
        %v1494 = vstv %s1493
        %v1495 = vmul.f32 %v1494, %v1491
        %v1496 = vmul.f32 %v1494, %v1492
        %1499 = vrot.lane.b32.xlu0 %v1495, 1
        %v1500 = vpop.permute.xlu0 %1499
        %1501 = vrot.lane.b32.xlu0 %v1496, 1
        %v1502 = vpop.permute.xlu0 %1501
        %v1505 = vadd.f32 %v1414, %v1500
        %v1506 = vadd.f32 %v1415, %v1502
        %s1507 = sld [smem:[#allocation8 + $0x3f]]
        %v1508 = vstv %s1507
        %v1509 = vmul.f32 %v1508, %v1491
        %v1510 = vmul.f32 %v1508, %v1492
        %1513 = vrot.lane.b32.xlu0 %v1509, 1
        %v1514 = vpop.permute.xlu0 %1513
        %1515 = vrot.lane.b32.xlu0 %v1510, 1
        %v1516 = vpop.permute.xlu0 %1515
        %v1519 = vadd.f32 %v1420, %v1514
        %v1520 = vadd.f32 %v1421, %v1516
        %s1521 = sld [smem:[#allocation8 + $0x63]]
        %v1522 = vstv %s1521
        %v1523 = vmul.f32 %v1522, %v1491
        %v1524 = vmul.f32 %v1522, %v1492
        %1527 = vrot.lane.b32.xlu0 %v1523, 1
        %v1528 = vpop.permute.xlu0 %1527
        %1529 = vrot.lane.b32.xlu0 %v1524, 1
        %v1530 = vpop.permute.xlu0 %1529
        %v1533 = vadd.f32 %v1426, %v1528
        %v1534 = vadd.f32 %v1427, %v1530
        %s1535 = sld [smem:[#allocation8 + $0x87]]
        %v1536 = vstv %s1535
        %v1537 = vmul.f32 %v1536, %v1491
        %v1538 = vmul.f32 %v1536, %v1492
        %1541 = vrot.lane.b32.xlu0 %v1537, 1
        %v1542 = vpop.permute.xlu0 %1541
        %1543 = vrot.lane.b32.xlu0 %v1538, 1
        %v1544 = vpop.permute.xlu0 %1543
        %v1547 = vadd.f32 %v1432, %v1542
        %v1548 = vadd.f32 %v1433, %v1544
        %s1549 = sld [smem:[#allocation8 + $0x1c]]
        %v1550 = vstv %s1549
        %v1551 = vmul.f32 %v1550, %v1491
        %v1552 = vmul.f32 %v1550, %v1492
        %1555 = vrot.lane.b32.xlu0 %v1551, 127
        %v1556 = vpop.permute.xlu0 %1555
        %1557 = vrot.lane.b32.xlu0 %v1552, 127
        %v1558 = vpop.permute.xlu0 %1557
        %v1561 = vadd.f32 %v1446, %v1556
        %v1562 = vadd.f32 %v1447, %v1558
        %s1563 = sld [smem:[#allocation8 + $0x40]]
        %v1564 = vstv %s1563
        %v1565 = vmul.f32 %v1564, %v1491
        %v1566 = vmul.f32 %v1564, %v1492
        %1569 = vrot.lane.b32.xlu0 %v1565, 127
        %v1570 = vpop.permute.xlu0 %1569
        %1571 = vrot.lane.b32.xlu0 %v1566, 127
        %v1572 = vpop.permute.xlu0 %1571
        %v1575 = vadd.f32 %v1460, %v1570
        %v1576 = vadd.f32 %v1461, %v1572
        %s1577 = sld [smem:[#allocation8 + $0x64]]
        %v1578 = vstv %s1577
        %v1579 = vmul.f32 %v1578, %v1491
        %v1580 = vmul.f32 %v1578, %v1492
        %1583 = vrot.lane.b32.xlu0 %v1579, 127
        %v1584 = vpop.permute.xlu0 %1583
        %1585 = vrot.lane.b32.xlu0 %v1580, 127
        %v1586 = vpop.permute.xlu0 %1585
        %v1589 = vadd.f32 %v1474, %v1584
        %v1590 = vadd.f32 %v1475, %v1586
        %s1591 = sld [smem:[#allocation8 + $0x88]]
        %v1592 = vstv %s1591
        %v1593 = vmul.f32 %v1592, %v1491
        %v1594 = vmul.f32 %v1592, %v1492
        %1597 = vrot.lane.b32.xlu0 %v1593, 127
        %v1598 = vpop.permute.xlu0 %1597
        %1599 = vrot.lane.b32.xlu0 %v1594, 127
        %v1600 = vpop.permute.xlu0 %1599
        %v1603 = vadd.f32 %v1488, %v1598
        %v1604 = vadd.f32 %v1489, %v1600
        %s1605 = sld [smem:[#allocation8 + $0x1d]]
        %v1606 = vstv %s1605
        %v1607 = vmul.f32 %v1606, %v1491
        %v1608 = vmul.f32 %v1606, %v1492
        %1611 = vrot.lane.b32.xlu0 %v1607, 127
        %v1612 = vpop.permute.xlu0 %1611
        %1613 = vrot.lane.b32.xlu0 %v1608, 127
        %v1614 = vpop.permute.xlu0 %1613
        %v1617 = vadd.f32 %v1505, %v1612
        %v1618 = vadd.f32 %v1506, %v1614
        %s1619 = sld [smem:[#allocation8 + $0x41]]
        %v1620 = vstv %s1619
        %v1621 = vmul.f32 %v1620, %v1491
        %v1622 = vmul.f32 %v1620, %v1492
        %1625 = vrot.lane.b32.xlu0 %v1621, 127
        %v1626 = vpop.permute.xlu0 %1625
        %1627 = vrot.lane.b32.xlu0 %v1622, 127
        %v1628 = vpop.permute.xlu0 %1627
        %v1631 = vadd.f32 %v1519, %v1626
        %v1632 = vadd.f32 %v1520, %v1628
        %s1633 = sld [smem:[#allocation8 + $0x65]]
        %v1634 = vstv %s1633
        %v1635 = vmul.f32 %v1634, %v1491
        %v1636 = vmul.f32 %v1634, %v1492
        %1639 = vrot.lane.b32.xlu0 %v1635, 127
        %v1640 = vpop.permute.xlu0 %1639
        %1641 = vrot.lane.b32.xlu0 %v1636, 127
        %v1642 = vpop.permute.xlu0 %1641
        %v1645 = vadd.f32 %v1533, %v1640
        %v1646 = vadd.f32 %v1534, %v1642
        %s1647 = sld [smem:[#allocation8 + $0x89]]
        %v1648 = vstv %s1647
        %v1649 = vmul.f32 %v1648, %v1491
        %v1650 = vmul.f32 %v1648, %v1492
        %1653 = vrot.lane.b32.xlu0 %v1649, 127
        %v1654 = vpop.permute.xlu0 %1653
        %1655 = vrot.lane.b32.xlu0 %v1650, 127
        %v1656 = vpop.permute.xlu0 %1655
        %v1659 = vadd.f32 %v1547, %v1654
        %v1660 = vadd.f32 %v1548, %v1656
        %v1661 = vld [vmem:[%s1490 + $0x1] sm:$0xff]
        %v1662 = vld [vmem:[%s1490 + $0x9] sm:$0xff]
        %s1663 = sld [smem:[#allocation8 + $0x1e]]
        %v1664 = vstv %s1663
        %v1665 = vmul.f32 %v1664, %v1661
        %v1666 = vmul.f32 %v1664, %v1662
        %v1667 = vadd.f32 %v1561, %v1665
        %v1668 = vadd.f32 %v1562, %v1666
        %s1669 = sld [smem:[#allocation8 + $0x42]]
        %v1670 = vstv %s1669
        %v1671 = vmul.f32 %v1670, %v1661
        %v1672 = vmul.f32 %v1670, %v1662
        %v1673 = vadd.f32 %v1575, %v1671
        %v1674 = vadd.f32 %v1576, %v1672
        %s1675 = sld [smem:[#allocation8 + $0x66]]
        %v1676 = vstv %s1675
        %v1677 = vmul.f32 %v1676, %v1661
        %v1678 = vmul.f32 %v1676, %v1662
        %v1679 = vadd.f32 %v1589, %v1677
        %v1680 = vadd.f32 %v1590, %v1678
        %s1681 = sld [smem:[#allocation8 + $0x8a]]
        %v1682 = vstv %s1681
        %v1683 = vmul.f32 %v1682, %v1661
        %v1684 = vmul.f32 %v1682, %v1662
        %v1685 = vadd.f32 %v1603, %v1683
        %v1686 = vadd.f32 %v1604, %v1684
        %s1687 = sld [smem:[#allocation8 + $0x1f]]
        %v1688 = vstv %s1687
        %v1689 = vmul.f32 %v1688, %v1661
        %v1690 = vmul.f32 %v1688, %v1662
        %v1691 = vadd.f32 %v1617, %v1689
        %v1692 = vadd.f32 %v1618, %v1690
        %s1693 = sld [smem:[#allocation8 + $0x43]]
        %v1694 = vstv %s1693
        %v1695 = vmul.f32 %v1694, %v1661
        %v1696 = vmul.f32 %v1694, %v1662
        %v1697 = vadd.f32 %v1631, %v1695
        %v1698 = vadd.f32 %v1632, %v1696
        %s1699 = sld [smem:[#allocation8 + $0x67]]
        %v1700 = vstv %s1699
        %v1701 = vmul.f32 %v1700, %v1661
        %v1702 = vmul.f32 %v1700, %v1662
        %v1703 = vadd.f32 %v1645, %v1701
        %v1704 = vadd.f32 %v1646, %v1702
        %s1705 = sld [smem:[#allocation8 + $0x8b]]
        %v1706 = vstv %s1705
        %v1707 = vmul.f32 %v1706, %v1661
        %v1708 = vmul.f32 %v1706, %v1662
        %v1709 = vadd.f32 %v1659, %v1707
        %v1710 = vadd.f32 %v1660, %v1708
        %s1711 = sld [smem:[#allocation8 + $0x20]]
        %v1712 = vstv %s1711
        %v1713 = vmul.f32 %v1712, %v1661
        %v1714 = vmul.f32 %v1712, %v1662
        %1717 = vrot.lane.b32.xlu0 %v1713, 126
        %v1718 = vpop.permute.xlu0 %1717
        %1719 = vrot.lane.b32.xlu0 %v1714, 126
        %v1720 = vpop.permute.xlu0 %1719
        %v1723 = vadd.f32 %v1667, %v1718
        %v1724 = vadd.f32 %v1668, %v1720
        %s1725 = sld [smem:[#allocation8 + $0x44]]
        %v1726 = vstv %s1725
        %v1727 = vmul.f32 %v1726, %v1661
        %v1728 = vmul.f32 %v1726, %v1662
        %1731 = vrot.lane.b32.xlu0 %v1727, 126
        %v1732 = vpop.permute.xlu0 %1731
        %1733 = vrot.lane.b32.xlu0 %v1728, 126
        %v1734 = vpop.permute.xlu0 %1733
        %v1737 = vadd.f32 %v1673, %v1732
        %v1738 = vadd.f32 %v1674, %v1734
        %s1739 = sld [smem:[#allocation8 + $0x68]]
        %v1740 = vstv %s1739
        %v1741 = vmul.f32 %v1740, %v1661
        %v1742 = vmul.f32 %v1740, %v1662
        %1745 = vrot.lane.b32.xlu0 %v1741, 126
        %v1746 = vpop.permute.xlu0 %1745
        %1747 = vrot.lane.b32.xlu0 %v1742, 126
        %v1748 = vpop.permute.xlu0 %1747
        %v1751 = vadd.f32 %v1679, %v1746
        %v1752 = vadd.f32 %v1680, %v1748
        %s1753 = sld [smem:[#allocation8 + $0x8c]]
        %v1754 = vstv %s1753
        %v1755 = vmul.f32 %v1754, %v1661
        %v1756 = vmul.f32 %v1754, %v1662
        %1759 = vrot.lane.b32.xlu0 %v1755, 126
        %v1760 = vpop.permute.xlu0 %1759
        %1761 = vrot.lane.b32.xlu0 %v1756, 126
        %v1762 = vpop.permute.xlu0 %1761
        %v1765 = vadd.f32 %v1685, %v1760
        %v1766 = vadd.f32 %v1686, %v1762
        %v1767 = vld [vmem:[%s1490 + $0x2] sm:$0xff]
        %v1768 = vld [vmem:[%s1490 + $0xa] sm:$0xff]
        %s1769 = sld [smem:[#allocation8 + $0x21]]
        %v1770 = vstv %s1769
        %v1771 = vmul.f32 %v1770, %v1767
        %v1772 = vmul.f32 %v1770, %v1768
        %1775 = vrot.lane.b32.xlu0 %v1771, 1
        %v1776 = vpop.permute.xlu0 %1775
        %1777 = vrot.lane.b32.xlu0 %v1772, 1
        %v1778 = vpop.permute.xlu0 %1777
        %v1781 = vadd.f32 %v1691, %v1776
        %v1782 = vadd.f32 %v1692, %v1778
        %s1783 = sld [smem:[#allocation8 + $0x45]]
        %v1784 = vstv %s1783
        %v1785 = vmul.f32 %v1784, %v1767
        %v1786 = vmul.f32 %v1784, %v1768
        %1789 = vrot.lane.b32.xlu0 %v1785, 1
        %v1790 = vpop.permute.xlu0 %1789
        %1791 = vrot.lane.b32.xlu0 %v1786, 1
        %v1792 = vpop.permute.xlu0 %1791
        %v1795 = vadd.f32 %v1697, %v1790
        %v1796 = vadd.f32 %v1698, %v1792
        %s1797 = sld [smem:[#allocation8 + $0x69]]
        %v1798 = vstv %s1797
        %v1799 = vmul.f32 %v1798, %v1767
        %v1800 = vmul.f32 %v1798, %v1768
        %1803 = vrot.lane.b32.xlu0 %v1799, 1
        %v1804 = vpop.permute.xlu0 %1803
        %1805 = vrot.lane.b32.xlu0 %v1800, 1
        %v1806 = vpop.permute.xlu0 %1805
        %v1809 = vadd.f32 %v1703, %v1804
        %v1810 = vadd.f32 %v1704, %v1806
        %s1811 = sld [smem:[#allocation8 + $0x8d]]
        %v1812 = vstv %s1811
        %v1813 = vmul.f32 %v1812, %v1767
        %v1814 = vmul.f32 %v1812, %v1768
        %1817 = vrot.lane.b32.xlu0 %v1813, 1
        %v1818 = vpop.permute.xlu0 %1817
        %1819 = vrot.lane.b32.xlu0 %v1814, 1
        %v1820 = vpop.permute.xlu0 %1819
        %v1823 = vadd.f32 %v1709, %v1818
        %v1824 = vadd.f32 %v1710, %v1820
        %s1825 = sld [smem:[#allocation8 + $0x22]]
        %v1826 = vstv %s1825
        %v1827 = vmul.f32 %v1826, %v1767
        %v1828 = vmul.f32 %v1826, %v1768
        %1831 = vrot.lane.b32.xlu0 %v1827, 127
        %v1832 = vpop.permute.xlu0 %1831
        %1833 = vrot.lane.b32.xlu0 %v1828, 127
        %v1834 = vpop.permute.xlu0 %1833
        %v1837 = vadd.f32 %v1723, %v1832
        %v1838 = vadd.f32 %v1724, %v1834
        %s1839 = sld [smem:[#allocation8 + $0x46]]
        %v1840 = vstv %s1839
        %v1841 = vmul.f32 %v1840, %v1767
        %v1842 = vmul.f32 %v1840, %v1768
        %1845 = vrot.lane.b32.xlu0 %v1841, 127
        %v1846 = vpop.permute.xlu0 %1845
        %1847 = vrot.lane.b32.xlu0 %v1842, 127
        %v1848 = vpop.permute.xlu0 %1847
        %v1851 = vadd.f32 %v1737, %v1846
        %v1852 = vadd.f32 %v1738, %v1848
        %s1853 = sld [smem:[#allocation8 + $0x6a]]
        %v1854 = vstv %s1853
        %v1855 = vmul.f32 %v1854, %v1767
        %v1856 = vmul.f32 %v1854, %v1768
        %1859 = vrot.lane.b32.xlu0 %v1855, 127
        %v1860 = vpop.permute.xlu0 %1859
        %1861 = vrot.lane.b32.xlu0 %v1856, 127
        %v1862 = vpop.permute.xlu0 %1861
        %v1865 = vadd.f32 %v1751, %v1860
        %v1866 = vadd.f32 %v1752, %v1862
        %s1867 = sld [smem:[#allocation8 + $0x8e]]
        %v1868 = vstv %s1867
        %v1869 = vmul.f32 %v1868, %v1767
        %v1870 = vmul.f32 %v1868, %v1768
        %1873 = vrot.lane.b32.xlu0 %v1869, 127
        %v1874 = vpop.permute.xlu0 %1873
        %1875 = vrot.lane.b32.xlu0 %v1870, 127
        %v1876 = vpop.permute.xlu0 %1875
        %v1879 = vadd.f32 %v1765, %v1874
        %v1880 = vadd.f32 %v1766, %v1876
        %s1881 = sld [smem:[#allocation8 + $0x23]]
        %v1882 = vstv %s1881
        %v1883 = vmul.f32 %v1882, %v1767
        %v1884 = vmul.f32 %v1882, %v1768
        %1887 = vrot.lane.b32.xlu0 %v1883, 127
        %v1888 = vpop.permute.xlu0 %1887
        %1889 = vrot.lane.b32.xlu0 %v1884, 127
        %v1890 = vpop.permute.xlu0 %1889
        %v1893 = vadd.f32 %v1781, %v1888
        %v1894 = vadd.f32 %v1782, %v1890
        %s1895 = sld [smem:[#allocation8 + $0x47]]
        %v1896 = vstv %s1895
        %v1897 = vmul.f32 %v1896, %v1767
        %v1898 = vmul.f32 %v1896, %v1768
        %1901 = vrot.lane.b32.xlu0 %v1897, 127
        %v1902 = vpop.permute.xlu0 %1901
        %1903 = vrot.lane.b32.xlu0 %v1898, 127
        %v1904 = vpop.permute.xlu0 %1903
        %v1907 = vadd.f32 %v1795, %v1902
        %v1908 = vadd.f32 %v1796, %v1904
        %s1909 = sld [smem:[#allocation8 + $0x6b]]
        %v1910 = vstv %s1909
        %v1911 = vmul.f32 %v1910, %v1767
        %v1912 = vmul.f32 %v1910, %v1768
        %1915 = vrot.lane.b32.xlu0 %v1911, 127
        %v1916 = vpop.permute.xlu0 %1915
        %1917 = vrot.lane.b32.xlu0 %v1912, 127
        %v1918 = vpop.permute.xlu0 %1917
        %v1921 = vadd.f32 %v1809, %v1916
        %v1922 = vadd.f32 %v1810, %v1918
        %s1923 = sld [smem:[#allocation8 + $0x8f]]
        %v1924 = vstv %s1923
        %v1925 = vmul.f32 %v1924, %v1767
        %v1926 = vmul.f32 %v1924, %v1768
        %1929 = vrot.lane.b32.xlu0 %v1925, 127
        %v1930 = vpop.permute.xlu0 %1929
        %1931 = vrot.lane.b32.xlu0 %v1926, 127
        %v1932 = vpop.permute.xlu0 %1931
        %v1935 = vadd.f32 %v1823, %v1930
        %v1936 = vadd.f32 %v1824, %v1932
        %1939 = vrot.lane.b32.xlu0 %v1893, 127
        %v1940 = vpop.permute.xlu0 %1939
        %1941 = vrot.lane.b32.xlu0 %v1894, 127
        %v1942 = vpop.permute.xlu0 %1941
        %v1945 = vadd.f32 %v1837, %v1940
        %v1946 = vadd.f32 %v1838, %v1942
        %1949 = vrot.lane.b32.xlu0 %v1907, 127
        %v1950 = vpop.permute.xlu0 %1949
        %1951 = vrot.lane.b32.xlu0 %v1908, 127
        %v1952 = vpop.permute.xlu0 %1951
        %v1955 = vadd.f32 %v1851, %v1950
        %v1956 = vadd.f32 %v1852, %v1952
        %1959 = vrot.lane.b32.xlu0 %v1921, 127
        %v1960 = vpop.permute.xlu0 %1959
        %1961 = vrot.lane.b32.xlu0 %v1922, 127
        %v1962 = vpop.permute.xlu0 %1961
        %v1965 = vadd.f32 %v1865, %v1960
        %v1966 = vadd.f32 %v1866, %v1962
        %1969 = vrot.lane.b32.xlu0 %v1935, 127
        %v1970 = vpop.permute.xlu0 %1969
        %1971 = vrot.lane.b32.xlu0 %v1936, 127
        %v1972 = vpop.permute.xlu0 %1971
        %v1975 = vadd.f32 %v1879, %v1970
        %v1976 = vadd.f32 %v1880, %v1972
        %s1977 = sld [smem:[#allocation9]]
        %v1978 = vstv %s1977
        %v1979 = vadd.f32 %v1945, %v1978
        %v1980 = vadd.f32 %v1946, %v1978
        %v1981 = vmax.f32 %v1979, 0.0
        %v1982 = vmax.f32 %v1980, 0.0
        %vm1983 = vcmask 130048
        %1984 = vst.msk [vmem:[%s217] sm:$0xff] %vm1983, %v1981
        %1985 = vst.msk [vmem:[%s217 + $0x8] sm:$0xff] %vm1983, %v1982
        %s1986 = sld [smem:[#allocation9 + $0x1]]
        %v1987 = vstv %s1986
        %v1988 = vadd.f32 %v1955, %v1987
        %v1989 = vadd.f32 %v1956, %v1987
        %v1990 = vmax.f32 %v1988, 0.0
        %v1991 = vmax.f32 %v1989, 0.0
        %s1992 = scalar_lea.vmem %s217, 16 [#allocation10]
        %1993 = vst.msk [vmem:[%s1992] sm:$0xff] %vm1983, %v1990
        %1994 = vst.msk [vmem:[%s1992 + $0x8] sm:$0xff] %vm1983, %v1991
        %s1995 = sld [smem:[#allocation9 + $0x2]]
        %v1996 = vstv %s1995
        %v1997 = vadd.f32 %v1965, %v1996
        %v1998 = vadd.f32 %v1966, %v1996
        %v1999 = vmax.f32 %v1997, 0.0
        %v2000 = vmax.f32 %v1998, 0.0
        %s2001 = scalar_lea.vmem %s217, 32 [#allocation10]
        %2002 = vst.msk [vmem:[%s2001] sm:$0xff] %vm1983, %v1999
        %2003 = vst.msk [vmem:[%s2001 + $0x8] sm:$0xff] %vm1983, %v2000
        %s2004 = sld [smem:[#allocation9 + $0x3]]
        %v2005 = vstv %s2004
        %v2006 = vadd.f32 %v1975, %v2005
        %v2007 = vadd.f32 %v1976, %v2005
        %v2008 = vmax.f32 %v2006, 0.0
        %v2009 = vmax.f32 %v2007, 0.0
        %s2010 = scalar_lea.vmem %s217, 48 [#allocation10]
        %2011 = vst.msk [vmem:[%s2010] sm:$0xff] %vm1983, %v2008
        %2012 = vst.msk [vmem:[%s2010 + $0x8] sm:$0xff] %vm1983, %v2009
        %s2013 = sand.u32 %s98, 1
        %s2014 = scalar_lea.sflag [#allocation5], %s2013
        %s2015 = sand.u32 %s98, 1
        %s2016 = smul.addr %s2015, 64
        %s2017 = scalar_lea.vmem [#allocation10], %s2016
        // Predicated region
        $region45: #{tpu_custom_call.1} parent=31 // pred_check
          %p2018 = pneg %p108
        $region46: #{tpu_custom_call.1} parent=31 // pred_check_branch
          %2020 = sbr.rel (%p2018) target = $region48
        $region47: #{tpu_custom_call.1} parent=31 // pred_region
          %2022 = vsyncadd %s2014, 0
          %s2023 = smul.addr %s22, 8
          %s2024 = smul.addr %s2023, 8
          %s2025 = scalar_lea.hbm %s3, %s2024
          %s2026 = sshll.u32 %s2017, 4
          %s2027 = int_to_ptr.vmem [resolvable:$true] %s2026
          %s2028 = sshll.u32 %s2025, 4
          %s2029 = int_to_ptr.hbm [resolvable:$true] %s2028
          %2034 = dma.vmem_to_hbm [thread:$0]  %s2027, 1024, %s2029, %s2014, 128, 128, 8
        $region48: #{tpu_custom_call.1} parent=31 // pred_fallthru
          _
      $region32: #{tpu_custom_call.1} parent=5 // pred_fallthru
        _
      %p2035 = scmp.le.s32.totalorder 2, %s17
      // Predicated region
      $region49: #{tpu_custom_call.1} parent=5 // pred_check
        %p2036 = pneg %p2035
      $region50: #{tpu_custom_call.1} parent=5 // pred_check_branch
        %2038 = sbr.rel (%p2036) target = $region52
      $region51: #{tpu_custom_call.1} parent=5 // pred_region
        %s2039 = ssub.s32 %s17, 2
        // Predicated region
        $region53: #{tpu_custom_call.1} parent=51 // pred_check
          %p2040 = pneg %p114
        $region54: #{tpu_custom_call.1} parent=51 // pred_check_branch
          %2042 = sbr.rel (%p2040) target = $region56
        $region55: #{tpu_custom_call.1} parent=51 // pred_region
          %s2043 = sand.u32 %s99, 1
          %s2044 = scalar_lea.sflag [#allocation5], %s2043
          %s2045 = sand.u32 %s99, 1
          %s2046 = smul.addr %s2045, 64
          %s2047 = scalar_lea.vmem [#allocation10], %s2046
          %2049 = dma.done %s2044, 1024
        $region56: #{tpu_custom_call.1} parent=51 // pred_fallthru
          _
      $region52: #{tpu_custom_call.1} parent=5 // pred_fallthru
        _
    $region6: #{tpu_custom_call.1} parent=1 // loop_footer
      %s21 = sadd.s32 1, %s17
    $region7: #{tpu_custom_call.1} parent=1 // loop_footer_branch
      %16 = sbr.rel target = $region3
    $region8: #{tpu_custom_call.1} parent=1 // loop_exit
      _
    %2050 = vsyncpa [#allocation4], 1
    %s2051 = scalar_lea.sflag [#allocation4], 1
    %2052 = vsyncpa %s2051, 1
    %2053 = vsyncpa [#allocation5], 1
    %s2054 = scalar_lea.sflag [#allocation5], 1
    %2055 = vsyncpa %s2054, 1
    %2056 = vsyncpa [#allocation6], 1
    %s2057 = scalar_lea.sflag [#allocation6], 1
    %2058 = vsyncpa %s2057, 1
    %2059 = vsyncpa [#allocation7], 1
    %s2060 = scalar_lea.sflag [#allocation7], 1
    %2061 = vsyncpa %s2060, 1

</llo_original>
